<compile_context>
chip_gen: v7x
topology: tpu7x:2x2x1
jax: 0.10.0
libtpu: 0.0.40
codegen_flags: <defaults>
</compile_context>

<pallas_src>
import jax
import jax.numpy as jnp
from jax.experimental import pallas as pl
from jax.experimental import pallas as _pl_unused  # keep namespace tidy
from jax.experimental.pallas import tpu as pltpu  # noqa: F401  (not required here)

# ---- problem sizes (hard-coded dims come from the module itself) ------------
B = 8          # batch_size (small)
S = 8          # third-sentence sequence length (small)
D_ELMO = 1024  # ELMo embedding dim (fixed by module: 1024)
D_ENC = 2048   # Encoder output dim (so that cat -> 1024 * 3 = 3072)
D_CAT = D_ENC + D_ELMO   # 3072
H = 32         # hidden dim of first Linear
C = 4          # number of classes
PARAM_ROWS = 40  # packed small-parameter block rows (multiple of 8)


def encoded_context_kernel(ctx_ref, third_ref, w1t_ref, params_ref, out_ref):
    # --- unpack the small-parameter block (tiny, ~20 KiB) --------------------
    p = params_ref[...]                                # (PARAM_ROWS, 128)
    w2 = p[0:H, 0:C]                                   # (32, 4)
    b1_row = p[H:H + 1, 0:H]                           # (1, 32)
    b2_row = p[H + 1:H + 2, 0:C]                       # (1, 4)
    inv_len = p[H + 2:H + 3, 0:B]                      # (1, B) = 1/third_lens

    # --- embed_single: sum ELMo embeddings over the sequence axis ------------
    # third_ref is (S, B, D): axis-0 reduction = cross-vreg VPU adds only.
    # Assumes lens > 0 (as in the module) and that padded ELMo positions are
    # zero, matching torch.sum over the full sequence axis.
    emb_sum = jnp.sum(third_ref[...], axis=0)          # (B, D_ELMO)

    # Transpose the SMALL activations on the XLU (not the 3072-row weight).
    ctx_t = ctx_ref[...].T                             # (D_ENC, B)   16 vregs
    emb_t = emb_sum.T                                  # (D_ELMO, B)   8 vregs

    # Lane-dense W1T (H, D_CAT): split along lanes with zero-cost static views.
    w1_ctx = w1t_ref[:, :D_ENC]                        # (H, D_ENC)
    w1_emb = w1t_ref[:, D_ENC:]                        # (H, D_ELMO)

    # cat([ctx, emb/len]) @ W1 + b1  ==  (W1_ctx @ ctx^T + invlen*(W1_emb @ emb^T))^T + b1
    # (the per-row 1/len scale commutes with the matmul; in this transposed
    #  orientation it is a per-column scale of the (H, B) result).
    h_t = (jnp.dot(w1_ctx, ctx_t, preferred_element_type=jnp.float32)
           + inv_len * jnp.dot(w1_emb, emb_t,
                               preferred_element_type=jnp.float32))   # (H, B)

    h = jnp.maximum(h_t.T + b1_row, 0.0)               # (B, H), 1-vreg transpose
    # Dropout(0.3): identity in eval mode.

    # --- second Linear --------------------------------------------------------
    logits = jnp.dot(h, w2, preferred_element_type=jnp.float32) + b2_row  # (B, C)
    out_ref[...] = logits.astype(out_ref.dtype)


def _full(shape):
    return pl.BlockSpec(shape, lambda: (0,) * len(shape))


@jax.jit
def encoded_context_forward(context_feat, third_emb, third_lens,
                            w1t, b1, w2, b2):
    """context_feat: (B, 2048) f32, third_emb: (B, S, 1024) f32,
       third_lens: (B,) f32, w1t: (32, 3072) lane-dense W1^T,
       b1: (32,), w2: (32, 4), b2: (4,)."""
    # (B, S, D) -> (S, B, D): same (8, 8, 1024) padded layout, but the kernel's
    # seq-sum becomes a VPU axis-0 reduction. Fuses into the jit prep.
    third_sbd = jnp.transpose(third_emb, (1, 0, 2)).astype(jnp.float32)

    # Pack all tiny operands into one lane-dense block -> one small DMA.
    inv_len = 1.0 / third_lens.astype(jnp.float32)                    # (B,)
    params = jnp.zeros((PARAM_ROWS, 128), jnp.float32)
    params = params.at[0:H, 0:C].set(w2.astype(jnp.float32))
    params = params.at[H, 0:H].set(b1.astype(jnp.float32))
    params = params.at[H + 1, 0:C].set(b2.astype(jnp.float32))
    params = params.at[H + 2, 0:B].set(inv_len)

    flops = 2 * B * D_CAT * H + 2 * B * H * C + B * S * D_ELMO
    bytes_accessed = 4 * (context_feat.size + third_sbd.size + w1t.size
                          + params.size + B * C)

    return pl.pallas_call(
        encoded_context_kernel,
        out_shape=jax.ShapeDtypeStruct((B, C), jnp.float32),
        in_specs=[
            _full((B, D_ENC)),            # context features
            _full((S, B, D_ELMO)),        # ELMo embeddings (seq-major)
            _full((H, D_CAT)),            # W1^T, lane-dense
            _full((PARAM_ROWS, 128)),     # packed [W2 | b1 | b2 | 1/len]
        ],
        out_specs=_full((B, C)),
        cost_estimate=pl.CostEstimate(flops=flops, transcendentals=0,
                                      bytes_accessed=bytes_accessed),
    )(context_feat, third_sbd, w1t, params)


def _reference(context_feat, third_emb, third_lens, w1, b1, w2, b2):
    embedded = jnp.sum(third_emb, axis=1) / third_lens[:, None]
    out = jnp.concatenate([context_feat, embedded], axis=1)
    h = jnp.maximum(out @ w1 + b1, 0.0)
    return h @ w2 + b2


if __name__ == "__main__":
    key = jax.random.PRNGKey(0)
    k_ctx, k_third, k_w1, k_b1, k_w2, k_b2 = jax.random.split(key, 6)

    # "Encoder" and "Elmo" outputs, modeled as precomputed inputs.
    context_feat = jax.random.normal(k_ctx, (B, D_ENC), dtype=jnp.float32)
    third_emb = jax.random.normal(k_third, (B, S, D_ELMO), dtype=jnp.float32)
    third_lens = jnp.arange(1, B + 1, dtype=jnp.float32)  # lengths 1..B

    # Deterministic Linear params (PyTorch-style uniform(-1/sqrt(fan_in), ...)).
    bound1 = 1.0 / jnp.sqrt(jnp.float32(D_CAT))
    w1 = jax.random.uniform(k_w1, (D_CAT, H), jnp.float32, -bound1, bound1)
    b1 = jax.random.uniform(k_b1, (H,), jnp.float32, -bound1, bound1)
    bound2 = 1.0 / jnp.sqrt(jnp.float32(H))
    w2 = jax.random.uniform(k_w2, (H, C), jnp.float32, -bound2, bound2)
    b2 = jax.random.uniform(k_b2, (C,), jnp.float32, -bound2, bound2)

    # One-time parameter prep: keep W1 lane-dense (minor dim 3072, not 32).
    w1t = jnp.asarray(w1.T)

    out = encoded_context_forward(context_feat, third_emb, third_lens,
                                  w1t, b1, w2, b2)
    out = jax.block_until_ready(out)

    ref = _reference(context_feat, third_emb, third_lens, w1, b1, w2, b2)
    assert out.shape == (B, C)
    assert jnp.allclose(out, ref, atol=1e-4, rtol=1e-4), "mismatch vs reference"

    print("KERNEL_OK")
</pallas_src>

<mosaic_0001>
module attributes {stable_mosaic.version = 11 : i64} {
  func.func @encoded_context_kernel(%arg0: memref<8x2048xf32, #tpu.memory_space<vmem>>, %arg1: memref<8x8x1024xf32, #tpu.memory_space<vmem>>, %arg2: memref<32x3072xf32, #tpu.memory_space<vmem>>, %arg3: memref<40x128xf32, #tpu.memory_space<vmem>>, %arg4: memref<8x4xf32, #tpu.memory_space<vmem>>) attributes {dimension_semantics = [], scalar_prefetch = 0 : i64, scratch_operands = 0 : i64, tpu.core_type = #tpu.core_type<tc>} {
    %c0 = arith.constant 0 : index
    %c0_0 = arith.constant 0 : index
    %0 = vector.load %arg3[%c0, %c0_0] : memref<40x128xf32, #tpu.memory_space<vmem>>, vector<40x128xf32>
    %1 = vector.extract_strided_slice %0 {offsets = [0, 0], sizes = [32, 4], strides = [1, 1]} : vector<40x128xf32> to vector<32x4xf32>
    %2 = vector.extract_strided_slice %0 {offsets = [32, 0], sizes = [1, 32], strides = [1, 1]} : vector<40x128xf32> to vector<1x32xf32>
    %3 = vector.extract_strided_slice %0 {offsets = [33, 0], sizes = [1, 4], strides = [1, 1]} : vector<40x128xf32> to vector<1x4xf32>
    %4 = vector.extract_strided_slice %0 {offsets = [34, 0], sizes = [1, 8], strides = [1, 1]} : vector<40x128xf32> to vector<1x8xf32>
    %c0_1 = arith.constant 0 : index
    %c0_2 = arith.constant 0 : index
    %c0_3 = arith.constant 0 : index
    %5 = vector.load %arg1[%c0_1, %c0_2, %c0_3] : memref<8x8x1024xf32, #tpu.memory_space<vmem>>, vector<8x8x1024xf32>
    %cst = arith.constant dense<0.000000e+00> : vector<8x1024xf32>
    %6 = vector.multi_reduction <add>, %5, %cst [0] : vector<8x8x1024xf32> to vector<8x1024xf32>
    %c0_4 = arith.constant 0 : index
    %c0_5 = arith.constant 0 : index
    %7 = vector.load %arg0[%c0_4, %c0_5] : memref<8x2048xf32, #tpu.memory_space<vmem>>, vector<8x2048xf32>
    %8 = tpu.transpose %7, [1, 0] : vector<8x2048xf32> -> vector<2048x8xf32>
    %9 = tpu.transpose %6, [1, 0] : vector<8x1024xf32> -> vector<1024x8xf32>
    %c0_6 = arith.constant 0 : index
    %c0_7 = arith.constant 0 : index
    %10 = vector.load %arg2[%c0_6, %c0_7] : memref<32x3072xf32, #tpu.memory_space<vmem>>, vector<32x2048xf32>
    %c0_8 = arith.constant 0 : index
    %c2048 = arith.constant 2048 : index
    %11 = vector.load %arg2[%c0_8, %c2048] : memref<32x3072xf32, #tpu.memory_space<vmem>>, vector<32x1024xf32>
    %cst_9 = arith.constant dense<0.000000e+00> : vector<32x8xf32>
    %12 = tpu.matmul %10, %8, %cst_9 {dimension_numbers = #tpu.dot_dimension_numbers<[1], [0], [0], [1], [0, 0, 1, 1], [], []>} : vector<32x2048xf32>, vector<2048x8xf32>, vector<32x8xf32> -> vector<32x8xf32>
    %cst_10 = arith.constant dense<0.000000e+00> : vector<32x8xf32>
    %13 = tpu.matmul %11, %9, %cst_10 {dimension_numbers = #tpu.dot_dimension_numbers<[1], [0], [0], [1], [0, 0, 1, 1], [], []>} : vector<32x1024xf32>, vector<1024x8xf32>, vector<32x8xf32> -> vector<32x8xf32>
    %14 = vector.broadcast %4 : vector<1x8xf32> to vector<32x8xf32>
    %15 = arith.mulf %14, %13 : vector<32x8xf32>
    %16 = arith.addf %12, %15 : vector<32x8xf32>
    %17 = tpu.transpose %16, [1, 0] : vector<32x8xf32> -> vector<8x32xf32>
    %18 = vector.broadcast %2 : vector<1x32xf32> to vector<8x32xf32>
    %19 = arith.addf %17, %18 : vector<8x32xf32>
    %cst_11 = arith.constant 0.000000e+00 : f32
    %20 = vector.broadcast %cst_11 : f32 to vector<8x32xf32>
    %21 = arith.maximumf %19, %20 : vector<8x32xf32>
    %cst_12 = arith.constant dense<0.000000e+00> : vector<8x4xf32>
    %22 = tpu.matmul %21, %1, %cst_12 {dimension_numbers = #tpu.dot_dimension_numbers<[1], [0], [0], [1], [0, 0, 1, 1], [], []>} : vector<8x32xf32>, vector<32x4xf32>, vector<8x4xf32> -> vector<8x4xf32>
    %23 = vector.broadcast %3 : vector<1x4xf32> to vector<8x4xf32>
    %24 = arith.addf %22, %23 : vector<8x4xf32>
    %c0_13 = arith.constant 0 : index
    %c0_14 = arith.constant 0 : index
    %25 = vector.load %arg4[%c0_13, %c0_14] : memref<8x4xf32, #tpu.memory_space<vmem>>, vector<8x4xf32>
    tpu.vector_store %arg4[%c0_13, %c0_14], %24 {strides = array<i32>} : memref<8x4xf32, #tpu.memory_space<vmem>>, vector<8x4xf32>,
    return
  }
}

</mosaic_0001>

<llo_original>
// kernel: encoded_context_forward.1
$region0: #{encoded_context_forward.1}
  #allocation0 [shape = 'u32[]', space=smem, size = 0x4, offset = 0x4, fixed_abs, tag = 'smem constant byte address 0x4 - core index']
  #allocation1 [shape = 'u32[144,128]{1,0:T(1,128)}', space=vmem, size = 0x12000, scoped, tag = 'internal scratch']
  %s0 = inlined_call_operand.vmem [shape: f32[8,2048], index: 0, kind: input, shape index: {}]
  %s1 = inlined_call_operand.vmem [shape: f32[8,8,1024], index: 1, kind: input, shape index: {}]
  %s2 = inlined_call_operand.vmem [shape: f32[32,3072], index: 2, kind: input, shape index: {}]
  %s3 = inlined_call_operand.vmem [shape: f32[40,128], index: 3, kind: input, shape index: {}]
  %s4 = inlined_call_operand.vmem [shape: f32[8,4], index: 4, kind: output, shape index: {}]
  %s5 = sld [smem:[#allocation0]]
  $region26: #{encoded_context_forward.1} parent=0
    _
  %s7 = ssub.s32 1, %s5
  %s8 = scalar_select 0, %s7, %s5
  // Predicated region
  $region2: #{encoded_context_forward.1} parent=0 // pred_check
    _
  $region3: #{encoded_context_forward.1} parent=0 // pred_check_branch
    %10 = sbr.rel (0) target = $region5
  $region4: #{encoded_context_forward.1} parent=0 // pred_region
    _
  $region5: #{encoded_context_forward.1} parent=0 // pred_fallthru
    _
  // Predicated region
  $region6: #{encoded_context_forward.1} parent=0 // pred_check
    _
  $region7: #{encoded_context_forward.1} parent=0 // pred_check_branch
    %12 = sbr.rel (0) target = $region9
  $region8: #{encoded_context_forward.1} parent=0 // pred_region
    _
  $region9: #{encoded_context_forward.1} parent=0 // pred_fallthru
    _
  // Predicated region
  $region10: #{encoded_context_forward.1} parent=0 // pred_check
    _
  $region11: #{encoded_context_forward.1} parent=0 // pred_check_branch
    %14 = sbr.rel (0) target = $region13
  $region12: #{encoded_context_forward.1} parent=0 // pred_region
    _
  $region13: #{encoded_context_forward.1} parent=0 // pred_fallthru
    _
  // Predicated region
  $region14: #{encoded_context_forward.1} parent=0 // pred_check
    _
  $region15: #{encoded_context_forward.1} parent=0 // pred_check_branch
    %16 = sbr.rel (0) target = $region17
  $region16: #{encoded_context_forward.1} parent=0 // pred_region
    _
  $region17: #{encoded_context_forward.1} parent=0 // pred_fallthru
    _
  %v17 = vld [vmem:[%s3] sm:$0xff]
  %v18 = vld [vmem:[%s3 + $0x8] sm:$0xff]
  %v19 = vld [vmem:[%s3 + $0x10] sm:$0xff]
  %v20 = vld [vmem:[%s3 + $0x18] sm:$0xff]
  %v21 = vld [vmem:[%s3 + $0x20] sm:$0xff]
  %v22 = vld [vmem:[%s1] sm:$0xff]
  %v23 = vld [vmem:[%s1 + $0x8] sm:$0xff]
  %v24 = vld [vmem:[%s1 + $0x10] sm:$0xff]
  %v25 = vld [vmem:[%s1 + $0x18] sm:$0xff]
  %v26 = vld [vmem:[%s1 + $0x20] sm:$0xff]
  %v27 = vld [vmem:[%s1 + $0x28] sm:$0xff]
  %v28 = vld [vmem:[%s1 + $0x30] sm:$0xff]
  %v29 = vld [vmem:[%s1 + $0x38] sm:$0xff]
  %v30 = vld [vmem:[%s1 + $0x40] sm:$0xff]
  %v31 = vld [vmem:[%s1 + $0x48] sm:$0xff]
  %v32 = vld [vmem:[%s1 + $0x50] sm:$0xff]
  %v33 = vld [vmem:[%s1 + $0x58] sm:$0xff]
  %v34 = vld [vmem:[%s1 + $0x60] sm:$0xff]
  %v35 = vld [vmem:[%s1 + $0x68] sm:$0xff]
  %v36 = vld [vmem:[%s1 + $0x70] sm:$0xff]
  %v37 = vld [vmem:[%s1 + $0x78] sm:$0xff]
  %v38 = vld [vmem:[%s1 + $0x80] sm:$0xff]
  %v39 = vld [vmem:[%s1 + $0x88] sm:$0xff]
  %v40 = vld [vmem:[%s1 + $0x90] sm:$0xff]
  %v41 = vld [vmem:[%s1 + $0x98] sm:$0xff]
  %v42 = vld [vmem:[%s1 + $0xa0] sm:$0xff]
  %v43 = vld [vmem:[%s1 + $0xa8] sm:$0xff]
  %v44 = vld [vmem:[%s1 + $0xb0] sm:$0xff]
  %v45 = vld [vmem:[%s1 + $0xb8] sm:$0xff]
  %v46 = vld [vmem:[%s1 + $0xc0] sm:$0xff]
  %v47 = vld [vmem:[%s1 + $0xc8] sm:$0xff]
  %v48 = vld [vmem:[%s1 + $0xd0] sm:$0xff]
  %v49 = vld [vmem:[%s1 + $0xd8] sm:$0xff]
  %v50 = vld [vmem:[%s1 + $0xe0] sm:$0xff]
  %v51 = vld [vmem:[%s1 + $0xe8] sm:$0xff]
  %v52 = vld [vmem:[%s1 + $0xf0] sm:$0xff]
  %v53 = vld [vmem:[%s1 + $0xf8] sm:$0xff]
  %v54 = vld [vmem:[%s1 + $0x100] sm:$0xff]
  %v55 = vld [vmem:[%s1 + $0x108] sm:$0xff]
  %v56 = vld [vmem:[%s1 + $0x110] sm:$0xff]
  %v57 = vld [vmem:[%s1 + $0x118] sm:$0xff]
  %v58 = vld [vmem:[%s1 + $0x120] sm:$0xff]
  %v59 = vld [vmem:[%s1 + $0x128] sm:$0xff]
  %v60 = vld [vmem:[%s1 + $0x130] sm:$0xff]
  %v61 = vld [vmem:[%s1 + $0x138] sm:$0xff]
  %v62 = vld [vmem:[%s1 + $0x140] sm:$0xff]
  %v63 = vld [vmem:[%s1 + $0x148] sm:$0xff]
  %v64 = vld [vmem:[%s1 + $0x150] sm:$0xff]
  %v65 = vld [vmem:[%s1 + $0x158] sm:$0xff]
  %v66 = vld [vmem:[%s1 + $0x160] sm:$0xff]
  %v67 = vld [vmem:[%s1 + $0x168] sm:$0xff]
  %v68 = vld [vmem:[%s1 + $0x170] sm:$0xff]
  %v69 = vld [vmem:[%s1 + $0x178] sm:$0xff]
  %v70 = vld [vmem:[%s1 + $0x180] sm:$0xff]
  %v71 = vld [vmem:[%s1 + $0x188] sm:$0xff]
  %v72 = vld [vmem:[%s1 + $0x190] sm:$0xff]
  %v73 = vld [vmem:[%s1 + $0x198] sm:$0xff]
  %v74 = vld [vmem:[%s1 + $0x1a0] sm:$0xff]
  %v75 = vld [vmem:[%s1 + $0x1a8] sm:$0xff]
  %v76 = vld [vmem:[%s1 + $0x1b0] sm:$0xff]
  %v77 = vld [vmem:[%s1 + $0x1b8] sm:$0xff]
  %v78 = vld [vmem:[%s1 + $0x1c0] sm:$0xff]
  %v79 = vld [vmem:[%s1 + $0x1c8] sm:$0xff]
  %v80 = vld [vmem:[%s1 + $0x1d0] sm:$0xff]
  %v81 = vld [vmem:[%s1 + $0x1d8] sm:$0xff]
  %v82 = vld [vmem:[%s1 + $0x1e0] sm:$0xff]
  %v83 = vld [vmem:[%s1 + $0x1e8] sm:$0xff]
  %v84 = vld [vmem:[%s1 + $0x1f0] sm:$0xff]
  %v85 = vld [vmem:[%s1 + $0x1f8] sm:$0xff]
  %v86 = vadd.f32 %v22, %v30
  %v87 = vadd.f32 %v86, %v38
  %v88 = vadd.f32 %v87, %v46
  %v89 = vadd.f32 %v88, %v54
  %v90 = vadd.f32 %v89, %v62
  %v91 = vadd.f32 %v90, %v70
  %v92 = vadd.f32 %v91, %v78
  %v93 = vadd.f32 %v23, %v31
  %v94 = vadd.f32 %v93, %v39
  %v95 = vadd.f32 %v94, %v47
  %v96 = vadd.f32 %v95, %v55
  %v97 = vadd.f32 %v96, %v63
  %v98 = vadd.f32 %v97, %v71
  %v99 = vadd.f32 %v98, %v79
  %v100 = vadd.f32 %v24, %v32
  %v101 = vadd.f32 %v100, %v40
  %v102 = vadd.f32 %v101, %v48
  %v103 = vadd.f32 %v102, %v56
  %v104 = vadd.f32 %v103, %v64
  %v105 = vadd.f32 %v104, %v72
  %v106 = vadd.f32 %v105, %v80
  %v107 = vadd.f32 %v25, %v33
  %v108 = vadd.f32 %v107, %v41
  %v109 = vadd.f32 %v108, %v49
  %v110 = vadd.f32 %v109, %v57
  %v111 = vadd.f32 %v110, %v65
  %v112 = vadd.f32 %v111, %v73
  %v113 = vadd.f32 %v112, %v81
  %v114 = vadd.f32 %v26, %v34
  %v115 = vadd.f32 %v114, %v42
  %v116 = vadd.f32 %v115, %v50
  %v117 = vadd.f32 %v116, %v58
  %v118 = vadd.f32 %v117, %v66
  %v119 = vadd.f32 %v118, %v74
  %v120 = vadd.f32 %v119, %v82
  %v121 = vadd.f32 %v27, %v35
  %v122 = vadd.f32 %v121, %v43
  %v123 = vadd.f32 %v122, %v51
  %v124 = vadd.f32 %v123, %v59
  %v125 = vadd.f32 %v124, %v67
  %v126 = vadd.f32 %v125, %v75
  %v127 = vadd.f32 %v126, %v83
  %v128 = vadd.f32 %v28, %v36
  %v129 = vadd.f32 %v128, %v44
  %v130 = vadd.f32 %v129, %v52
  %v131 = vadd.f32 %v130, %v60
  %v132 = vadd.f32 %v131, %v68
  %v133 = vadd.f32 %v132, %v76
  %v134 = vadd.f32 %v133, %v84
  %v135 = vadd.f32 %v29, %v37
  %v136 = vadd.f32 %v135, %v45
  %v137 = vadd.f32 %v136, %v53
  %v138 = vadd.f32 %v137, %v61
  %v139 = vadd.f32 %v138, %v69
  %v140 = vadd.f32 %v139, %v77
  %v141 = vadd.f32 %v140, %v85
  %v142 = vld [vmem:[%s0] sm:$0xff]
  %v143 = vld [vmem:[%s0 + $0x8] sm:$0xff]
  %v144 = vld [vmem:[%s0 + $0x10] sm:$0xff]
  %v145 = vld [vmem:[%s0 + $0x18] sm:$0xff]
  %v146 = vld [vmem:[%s0 + $0x20] sm:$0xff]
  %v147 = vld [vmem:[%s0 + $0x28] sm:$0xff]
  %v148 = vld [vmem:[%s0 + $0x30] sm:$0xff]
  %v149 = vld [vmem:[%s0 + $0x38] sm:$0xff]
  %v150 = vld [vmem:[%s0 + $0x40] sm:$0xff]
  %v151 = vld [vmem:[%s0 + $0x48] sm:$0xff]
  %v152 = vld [vmem:[%s0 + $0x50] sm:$0xff]
  %v153 = vld [vmem:[%s0 + $0x58] sm:$0xff]
  %v154 = vld [vmem:[%s0 + $0x60] sm:$0xff]
  %v155 = vld [vmem:[%s0 + $0x68] sm:$0xff]
  %v156 = vld [vmem:[%s0 + $0x70] sm:$0xff]
  %v157 = vld [vmem:[%s0 + $0x78] sm:$0xff]
  %v158 = vld [vmem:[%s2] sm:$0xff]
  %v159 = vld [vmem:[%s2 + $0x8] sm:$0xff]
  %v160 = vld [vmem:[%s2 + $0x10] sm:$0xff]
  %v161 = vld [vmem:[%s2 + $0x18] sm:$0xff]
  %v162 = vld [vmem:[%s2 + $0x20] sm:$0xff]
  %v163 = vld [vmem:[%s2 + $0x28] sm:$0xff]
  %v164 = vld [vmem:[%s2 + $0x30] sm:$0xff]
  %v165 = vld [vmem:[%s2 + $0x38] sm:$0xff]
  %v166 = vld [vmem:[%s2 + $0x40] sm:$0xff]
  %v167 = vld [vmem:[%s2 + $0x48] sm:$0xff]
  %v168 = vld [vmem:[%s2 + $0x50] sm:$0xff]
  %v169 = vld [vmem:[%s2 + $0x58] sm:$0xff]
  %v170 = vld [vmem:[%s2 + $0x60] sm:$0xff]
  %v171 = vld [vmem:[%s2 + $0x68] sm:$0xff]
  %v172 = vld [vmem:[%s2 + $0x70] sm:$0xff]
  %v173 = vld [vmem:[%s2 + $0x78] sm:$0xff]
  %v174 = vld [vmem:[%s2 + $0xc0] sm:$0xff]
  %v175 = vld [vmem:[%s2 + $0xc8] sm:$0xff]
  %v176 = vld [vmem:[%s2 + $0xd0] sm:$0xff]
  %v177 = vld [vmem:[%s2 + $0xd8] sm:$0xff]
  %v178 = vld [vmem:[%s2 + $0xe0] sm:$0xff]
  %v179 = vld [vmem:[%s2 + $0xe8] sm:$0xff]
  %v180 = vld [vmem:[%s2 + $0xf0] sm:$0xff]
  %v181 = vld [vmem:[%s2 + $0xf8] sm:$0xff]
  %v182 = vld [vmem:[%s2 + $0x100] sm:$0xff]
  %v183 = vld [vmem:[%s2 + $0x108] sm:$0xff]
  %v184 = vld [vmem:[%s2 + $0x110] sm:$0xff]
  %v185 = vld [vmem:[%s2 + $0x118] sm:$0xff]
  %v186 = vld [vmem:[%s2 + $0x120] sm:$0xff]
  %v187 = vld [vmem:[%s2 + $0x128] sm:$0xff]
  %v188 = vld [vmem:[%s2 + $0x130] sm:$0xff]
  %v189 = vld [vmem:[%s2 + $0x138] sm:$0xff]
  %v190 = vld [vmem:[%s2 + $0x180] sm:$0xff]
  %v191 = vld [vmem:[%s2 + $0x188] sm:$0xff]
  %v192 = vld [vmem:[%s2 + $0x190] sm:$0xff]
  %v193 = vld [vmem:[%s2 + $0x198] sm:$0xff]
  %v194 = vld [vmem:[%s2 + $0x1a0] sm:$0xff]
  %v195 = vld [vmem:[%s2 + $0x1a8] sm:$0xff]
  %v196 = vld [vmem:[%s2 + $0x1b0] sm:$0xff]
  %v197 = vld [vmem:[%s2 + $0x1b8] sm:$0xff]
  %v198 = vld [vmem:[%s2 + $0x1c0] sm:$0xff]
  %v199 = vld [vmem:[%s2 + $0x1c8] sm:$0xff]
  %v200 = vld [vmem:[%s2 + $0x1d0] sm:$0xff]
  %v201 = vld [vmem:[%s2 + $0x1d8] sm:$0xff]
  %v202 = vld [vmem:[%s2 + $0x1e0] sm:$0xff]
  %v203 = vld [vmem:[%s2 + $0x1e8] sm:$0xff]
  %v204 = vld [vmem:[%s2 + $0x1f0] sm:$0xff]
  %v205 = vld [vmem:[%s2 + $0x1f8] sm:$0xff]
  %v206 = vld [vmem:[%s2 + $0x240] sm:$0xff]
  %v207 = vld [vmem:[%s2 + $0x248] sm:$0xff]
  %v208 = vld [vmem:[%s2 + $0x250] sm:$0xff]
  %v209 = vld [vmem:[%s2 + $0x258] sm:$0xff]
  %v210 = vld [vmem:[%s2 + $0x260] sm:$0xff]
  %v211 = vld [vmem:[%s2 + $0x268] sm:$0xff]
  %v212 = vld [vmem:[%s2 + $0x270] sm:$0xff]
  %v213 = vld [vmem:[%s2 + $0x278] sm:$0xff]
  %v214 = vld [vmem:[%s2 + $0x280] sm:$0xff]
  %v215 = vld [vmem:[%s2 + $0x288] sm:$0xff]
  %v216 = vld [vmem:[%s2 + $0x290] sm:$0xff]
  %v217 = vld [vmem:[%s2 + $0x298] sm:$0xff]
  %v218 = vld [vmem:[%s2 + $0x2a0] sm:$0xff]
  %v219 = vld [vmem:[%s2 + $0x2a8] sm:$0xff]
  %v220 = vld [vmem:[%s2 + $0x2b0] sm:$0xff]
  %v221 = vld [vmem:[%s2 + $0x2b8] sm:$0xff]
  %v222 = vld [vmem:[%s2 + $0x80] sm:$0xff]
  %v223 = vld [vmem:[%s2 + $0x88] sm:$0xff]
  %v224 = vld [vmem:[%s2 + $0x90] sm:$0xff]
  %v225 = vld [vmem:[%s2 + $0x98] sm:$0xff]
  %v226 = vld [vmem:[%s2 + $0xa0] sm:$0xff]
  %v227 = vld [vmem:[%s2 + $0xa8] sm:$0xff]
  %v228 = vld [vmem:[%s2 + $0xb0] sm:$0xff]
  %v229 = vld [vmem:[%s2 + $0xb8] sm:$0xff]
  %v230 = vld [vmem:[%s2 + $0x140] sm:$0xff]
  %v231 = vld [vmem:[%s2 + $0x148] sm:$0xff]
  %v232 = vld [vmem:[%s2 + $0x150] sm:$0xff]
  %v233 = vld [vmem:[%s2 + $0x158] sm:$0xff]
  %v234 = vld [vmem:[%s2 + $0x160] sm:$0xff]
  %v235 = vld [vmem:[%s2 + $0x168] sm:$0xff]
  %v236 = vld [vmem:[%s2 + $0x170] sm:$0xff]
  %v237 = vld [vmem:[%s2 + $0x178] sm:$0xff]
  %v238 = vld [vmem:[%s2 + $0x200] sm:$0xff]
  %v239 = vld [vmem:[%s2 + $0x208] sm:$0xff]
  %v240 = vld [vmem:[%s2 + $0x210] sm:$0xff]
  %v241 = vld [vmem:[%s2 + $0x218] sm:$0xff]
  %v242 = vld [vmem:[%s2 + $0x220] sm:$0xff]
  %v243 = vld [vmem:[%s2 + $0x228] sm:$0xff]
  %v244 = vld [vmem:[%s2 + $0x230] sm:$0xff]
  %v245 = vld [vmem:[%s2 + $0x238] sm:$0xff]
  %v246 = vld [vmem:[%s2 + $0x2c0] sm:$0xff]
  %v247 = vld [vmem:[%s2 + $0x2c8] sm:$0xff]
  %v248 = vld [vmem:[%s2 + $0x2d0] sm:$0xff]
  %v249 = vld [vmem:[%s2 + $0x2d8] sm:$0xff]
  %v250 = vld [vmem:[%s2 + $0x2e0] sm:$0xff]
  %v251 = vld [vmem:[%s2 + $0x2e8] sm:$0xff]
  %v252 = vld [vmem:[%s2 + $0x2f0] sm:$0xff]
  %v253 = vld [vmem:[%s2 + $0x2f8] sm:$0xff]
  %254 = vmatprep.subr.mxu0 %v99
  %255 = vmatpush1.xpose.msra.mxu0 %v92
  %256 = vmatprep.subr.mxu0 0.0
  %257 = vmatpush1.xpose.msra.mxu0 0.0
  %258 = vmatprep.subr.mxu0 0.0
  %259 = vmatpush1.xpose.msra.mxu0 0.0
  %260 = vmatprep.subr.mxu0 0.0
  %261 = vmatpush1.xpose.msra.mxu0 0.0
  %262 = vmatprep.subr.mxu0 0.0
  %263 = vmatpush1.xpose.msra.mxu0 0.0
  %264 = vmatprep.subr.mxu0 0.0
  %265 = vmatpush1.xpose.msra.mxu0 0.0
  %266 = vmatprep.subr.mxu0 0.0
  %267 = vmatpush1.xpose.msra.mxu0 0.0
  %268 = vmatprep.subr.mxu0 0.0
  %269 = vmatpush1.xpose.msra.mxu0 0.0
  %270 = vmatprep.subr.mxu0 0.0
  %271 = vmatpush1.xpose.msra.mxu0 0.0
  %272 = vmatprep.subr.mxu0 0.0
  %273 = vmatpush1.xpose.msra.mxu0 0.0
  %274 = vmatprep.subr.mxu0 0.0
  %275 = vmatpush1.xpose.msra.mxu0 0.0
  %276 = vmatprep.subr.mxu0 0.0
  %277 = vmatpush1.xpose.msra.mxu0 0.0
  %278 = vmatprep.subr.mxu0 0.0
  %279 = vmatpush1.xpose.msra.mxu0 0.0
  %280 = vmatprep.subr.mxu0 0.0
  %281 = vmatpush1.xpose.msra.mxu0 0.0
  %282 = vmatprep.subr.mxu0 0.0
  %283 = vmatpush1.xpose.msra.mxu0 0.0
  %284 = vmatprep.subr.mxu0 0.0
  %285 = vmatpush1.xpose.msra.mxu0 0.0
  %286 = vmatprep.subr.mxu0 0.0
  %287 = vmatpush1.xpose.msra.mxu0 0.0
  %288 = vmatprep.subr.mxu0 0.0
  %289 = vmatpush1.xpose.msra.mxu0 0.0
  %290 = vmatprep.subr.mxu0 0.0
  %291 = vmatpush1.xpose.msra.mxu0 0.0
  %292 = vmatprep.subr.mxu0 0.0
  %293 = vmatpush1.xpose.msra.mxu0 0.0
  %294 = vmatprep.subr.mxu0 0.0
  %295 = vmatpush1.xpose.msra.mxu0 0.0
  %296 = vmatprep.subr.mxu0 0.0
  %297 = vmatpush1.xpose.msra.mxu0 0.0
  %298 = vmatprep.subr.mxu0 0.0
  %299 = vmatpush1.xpose.msra.mxu0 0.0
  %300 = vmatprep.subr.mxu0 0.0
  %301 = vmatpush1.xpose.msra.mxu0 0.0
  %302 = vmatprep.subr.mxu0 0.0
  %303 = vmatpush1.xpose.msra.mxu0 0.0
  %304 = vmatprep.subr.mxu0 0.0
  %305 = vmatpush1.xpose.msra.mxu0 0.0
  %306 = vmatprep.subr.mxu0 0.0
  %307 = vmatpush1.xpose.msra.mxu0 0.0
  %308 = vmatprep.subr.mxu0 0.0
  %309 = vmatpush1.xpose.msra.mxu0 0.0
  %310 = vmatprep.subr.mxu0 0.0
  %311 = vmatpush1.xpose.msra.mxu0 0.0
  %312 = vmatprep.subr.mxu0 0.0
  %313 = vmatpush1.xpose.msra.mxu0 0.0
  %314 = vmatprep.subr.mxu0 0.0
  %315 = vmatpush1.xpose.msra.mxu0 0.0
  %316 = vmatprep.subr.mxu0 0.0
  %317 = vmatpush1.xpose.msra.mxu0 0.0
  %318 = vmatprep.mubr.f32.mxu0 %v223
  %319 = vmatmul.mubr.f32.gmra.mrb[0].mxu0 %v222
  %v320 = vpop.f32.mrb[0].mxu0
  %v321 = vadd.f32 0.0, %v320
  %v322 = vpop.f32.mrb[0].mxu0
  %323 = vmatprep.mubr.f32.mxu0 %v231
  %324 = vmatmul.mubr.f32.gmra.mrb[0].mxu0 %v230
  %v325 = vpop.f32.mrb[0].mxu0
  %v326 = vadd.f32 0.0, %v325
  %v327 = vpop.f32.mrb[0].mxu0
  %328 = vmatprep.mubr.f32.mxu0 %v239
  %329 = vmatmul.mubr.f32.gmra.mrb[0].mxu0 %v238
  %v330 = vpop.f32.mrb[0].mxu0
  %v331 = vadd.f32 0.0, %v330
  %v332 = vpop.f32.mrb[0].mxu0
  %333 = vmatprep.mubr.f32.mxu0 %v247
  %334 = vmatmul.mubr.f32.gmra.mrb[0].mxu0 %v246
  %v335 = vpop.f32.mrb[0].mxu0
  %v336 = vadd.f32 0.0, %v335
  %v337 = vpop.f32.mrb[0].mxu0
  %338 = vdwg.mxu0
  %339 = vmatprep.subr.mxu0 %v113
  %340 = vmatpush1.xpose.msra.mxu0 %v106
  %341 = vmatprep.subr.mxu0 0.0
  %342 = vmatpush1.xpose.msra.mxu0 0.0
  %343 = vmatprep.subr.mxu0 0.0
  %344 = vmatpush1.xpose.msra.mxu0 0.0
  %345 = vmatprep.subr.mxu0 0.0
  %346 = vmatpush1.xpose.msra.mxu0 0.0
  %347 = vmatprep.subr.mxu0 0.0
  %348 = vmatpush1.xpose.msra.mxu0 0.0
  %349 = vmatprep.subr.mxu0 0.0
  %350 = vmatpush1.xpose.msra.mxu0 0.0
  %351 = vmatprep.subr.mxu0 0.0
  %352 = vmatpush1.xpose.msra.mxu0 0.0
  %353 = vmatprep.subr.mxu0 0.0
  %354 = vmatpush1.xpose.msra.mxu0 0.0
  %355 = vmatprep.subr.mxu0 0.0
  %356 = vmatpush1.xpose.msra.mxu0 0.0
  %357 = vmatprep.subr.mxu0 0.0
  %358 = vmatpush1.xpose.msra.mxu0 0.0
  %359 = vmatprep.subr.mxu0 0.0
  %360 = vmatpush1.xpose.msra.mxu0 0.0
  %361 = vmatprep.subr.mxu0 0.0
  %362 = vmatpush1.xpose.msra.mxu0 0.0
  %363 = vmatprep.subr.mxu0 0.0
  %364 = vmatpush1.xpose.msra.mxu0 0.0
  %365 = vmatprep.subr.mxu0 0.0
  %366 = vmatpush1.xpose.msra.mxu0 0.0
  %367 = vmatprep.subr.mxu0 0.0
  %368 = vmatpush1.xpose.msra.mxu0 0.0
  %369 = vmatprep.subr.mxu0 0.0
  %370 = vmatpush1.xpose.msra.mxu0 0.0
  %371 = vmatprep.subr.mxu0 0.0
  %372 = vmatpush1.xpose.msra.mxu0 0.0
  %373 = vmatprep.subr.mxu0 0.0
  %374 = vmatpush1.xpose.msra.mxu0 0.0
  %375 = vmatprep.subr.mxu0 0.0
  %376 = vmatpush1.xpose.msra.mxu0 0.0
  %377 = vmatprep.subr.mxu0 0.0
  %378 = vmatpush1.xpose.msra.mxu0 0.0
  %379 = vmatprep.subr.mxu0 0.0
  %380 = vmatpush1.xpose.msra.mxu0 0.0
  %381 = vmatprep.subr.mxu0 0.0
  %382 = vmatpush1.xpose.msra.mxu0 0.0
  %383 = vmatprep.subr.mxu0 0.0
  %384 = vmatpush1.xpose.msra.mxu0 0.0
  %385 = vmatprep.subr.mxu0 0.0
  %386 = vmatpush1.xpose.msra.mxu0 0.0
  %387 = vmatprep.subr.mxu0 0.0
  %388 = vmatpush1.xpose.msra.mxu0 0.0
  %389 = vmatprep.subr.mxu0 0.0
  %390 = vmatpush1.xpose.msra.mxu0 0.0
  %391 = vmatprep.subr.mxu0 0.0
  %392 = vmatpush1.xpose.msra.mxu0 0.0
  %393 = vmatprep.subr.mxu0 0.0
  %394 = vmatpush1.xpose.msra.mxu0 0.0
  %395 = vmatprep.subr.mxu0 0.0
  %396 = vmatpush1.xpose.msra.mxu0 0.0
  %397 = vmatprep.subr.mxu0 0.0
  %398 = vmatpush1.xpose.msra.mxu0 0.0
  %399 = vmatprep.subr.mxu0 0.0
  %400 = vmatpush1.xpose.msra.mxu0 0.0
  %401 = vmatprep.subr.mxu0 0.0
  %402 = vmatpush1.xpose.msra.mxu0 0.0
  %403 = vmatprep.mubr.f32.mxu0 %v225
  %404 = vmatmul.mubr.f32.gmra.mrb[0].mxu0 %v224
  %v405 = vpop.f32.mrb[0].mxu0
  %v406 = vadd.f32 %v321, %v405
  %v407 = vpop.f32.mrb[0].mxu0
  %408 = vmatprep.mubr.f32.mxu0 %v233
  %409 = vmatmul.mubr.f32.gmra.mrb[0].mxu0 %v232
  %v410 = vpop.f32.mrb[0].mxu0
  %v411 = vadd.f32 %v326, %v410
  %v412 = vpop.f32.mrb[0].mxu0
  %413 = vmatprep.mubr.f32.mxu0 %v241
  %414 = vmatmul.mubr.f32.gmra.mrb[0].mxu0 %v240
  %v415 = vpop.f32.mrb[0].mxu0
  %v416 = vadd.f32 %v331, %v415
  %v417 = vpop.f32.mrb[0].mxu0
  %418 = vmatprep.mubr.f32.mxu0 %v249
  %419 = vmatmul.mubr.f32.gmra.mrb[0].mxu0 %v248
  %v420 = vpop.f32.mrb[0].mxu0
  %v421 = vadd.f32 %v336, %v420
  %v422 = vpop.f32.mrb[0].mxu0
  %423 = vdwg.mxu0
  %424 = vmatprep.subr.mxu0 %v127
  %425 = vmatpush1.xpose.msra.mxu0 %v120
  %426 = vmatprep.subr.mxu0 0.0
  %427 = vmatpush1.xpose.msra.mxu0 0.0
  %428 = vmatprep.subr.mxu0 0.0
  %429 = vmatpush1.xpose.msra.mxu0 0.0
  %430 = vmatprep.subr.mxu0 0.0
  %431 = vmatpush1.xpose.msra.mxu0 0.0
  %432 = vmatprep.subr.mxu0 0.0
  %433 = vmatpush1.xpose.msra.mxu0 0.0
  %434 = vmatprep.subr.mxu0 0.0
  %435 = vmatpush1.xpose.msra.mxu0 0.0
  %436 = vmatprep.subr.mxu0 0.0
  %437 = vmatpush1.xpose.msra.mxu0 0.0
  %438 = vmatprep.subr.mxu0 0.0
  %439 = vmatpush1.xpose.msra.mxu0 0.0
  %440 = vmatprep.subr.mxu0 0.0
  %441 = vmatpush1.xpose.msra.mxu0 0.0
  %442 = vmatprep.subr.mxu0 0.0
  %443 = vmatpush1.xpose.msra.mxu0 0.0
  %444 = vmatprep.subr.mxu0 0.0
  %445 = vmatpush1.xpose.msra.mxu0 0.0
  %446 = vmatprep.subr.mxu0 0.0
  %447 = vmatpush1.xpose.msra.mxu0 0.0
  %448 = vmatprep.subr.mxu0 0.0
  %449 = vmatpush1.xpose.msra.mxu0 0.0
  %450 = vmatprep.subr.mxu0 0.0
  %451 = vmatpush1.xpose.msra.mxu0 0.0
  %452 = vmatprep.subr.mxu0 0.0
  %453 = vmatpush1.xpose.msra.mxu0 0.0
  %454 = vmatprep.subr.mxu0 0.0
  %455 = vmatpush1.xpose.msra.mxu0 0.0
  %456 = vmatprep.subr.mxu0 0.0
  %457 = vmatpush1.xpose.msra.mxu0 0.0
  %458 = vmatprep.subr.mxu0 0.0
  %459 = vmatpush1.xpose.msra.mxu0 0.0
  %460 = vmatprep.subr.mxu0 0.0
  %461 = vmatpush1.xpose.msra.mxu0 0.0
  %462 = vmatprep.subr.mxu0 0.0
  %463 = vmatpush1.xpose.msra.mxu0 0.0
  %464 = vmatprep.subr.mxu0 0.0
  %465 = vmatpush1.xpose.msra.mxu0 0.0
  %466 = vmatprep.subr.mxu0 0.0
  %467 = vmatpush1.xpose.msra.mxu0 0.0
  %468 = vmatprep.subr.mxu0 0.0
  %469 = vmatpush1.xpose.msra.mxu0 0.0
  %470 = vmatprep.subr.mxu0 0.0
  %471 = vmatpush1.xpose.msra.mxu0 0.0
  %472 = vmatprep.subr.mxu0 0.0
  %473 = vmatpush1.xpose.msra.mxu0 0.0
  %474 = vmatprep.subr.mxu0 0.0
  %475 = vmatpush1.xpose.msra.mxu0 0.0
  %476 = vmatprep.subr.mxu0 0.0
  %477 = vmatpush1.xpose.msra.mxu0 0.0
  %478 = vmatprep.subr.mxu0 0.0
  %479 = vmatpush1.xpose.msra.mxu0 0.0
  %480 = vmatprep.subr.mxu0 0.0
  %481 = vmatpush1.xpose.msra.mxu0 0.0
  %482 = vmatprep.subr.mxu0 0.0
  %483 = vmatpush1.xpose.msra.mxu0 0.0
  %484 = vmatprep.subr.mxu0 0.0
  %485 = vmatpush1.xpose.msra.mxu0 0.0
  %486 = vmatprep.subr.mxu0 0.0
  %487 = vmatpush1.xpose.msra.mxu0 0.0
  %488 = vmatprep.mubr.f32.mxu0 %v227
  %489 = vmatmul.mubr.f32.gmra.mrb[0].mxu0 %v226
  %v490 = vpop.f32.mrb[0].mxu0
  %v491 = vadd.f32 %v406, %v490
  %v492 = vpop.f32.mrb[0].mxu0
  %493 = vmatprep.mubr.f32.mxu0 %v235
  %494 = vmatmul.mubr.f32.gmra.mrb[0].mxu0 %v234
  %v495 = vpop.f32.mrb[0].mxu0
  %v496 = vadd.f32 %v411, %v495
  %v497 = vpop.f32.mrb[0].mxu0
  %498 = vmatprep.mubr.f32.mxu0 %v243
  %499 = vmatmul.mubr.f32.gmra.mrb[0].mxu0 %v242
  %v500 = vpop.f32.mrb[0].mxu0
  %v501 = vadd.f32 %v416, %v500
  %v502 = vpop.f32.mrb[0].mxu0
  %503 = vmatprep.mubr.f32.mxu0 %v251
  %504 = vmatmul.mubr.f32.gmra.mrb[0].mxu0 %v250
  %v505 = vpop.f32.mrb[0].mxu0
  %v506 = vadd.f32 %v421, %v505
  %v507 = vpop.f32.mrb[0].mxu0
  %508 = vdwg.mxu0
  %509 = vmatprep.subr.mxu0 %v141
  %510 = vmatpush1.xpose.msra.mxu0 %v134
  %511 = vmatprep.subr.mxu0 0.0
  %512 = vmatpush1.xpose.msra.mxu0 0.0
  %513 = vmatprep.subr.mxu0 0.0
  %514 = vmatpush1.xpose.msra.mxu0 0.0
  %515 = vmatprep.subr.mxu0 0.0
  %516 = vmatpush1.xpose.msra.mxu0 0.0
  %517 = vmatprep.subr.mxu0 0.0
  %518 = vmatpush1.xpose.msra.mxu0 0.0
  %519 = vmatprep.subr.mxu0 0.0
  %520 = vmatpush1.xpose.msra.mxu0 0.0
  %521 = vmatprep.subr.mxu0 0.0
  %522 = vmatpush1.xpose.msra.mxu0 0.0
  %523 = vmatprep.subr.mxu0 0.0
  %524 = vmatpush1.xpose.msra.mxu0 0.0
  %525 = vmatprep.subr.mxu0 0.0
  %526 = vmatpush1.xpose.msra.mxu0 0.0
  %527 = vmatprep.subr.mxu0 0.0
  %528 = vmatpush1.xpose.msra.mxu0 0.0
  %529 = vmatprep.subr.mxu0 0.0
  %530 = vmatpush1.xpose.msra.mxu0 0.0
  %531 = vmatprep.subr.mxu0 0.0
  %532 = vmatpush1.xpose.msra.mxu0 0.0
  %533 = vmatprep.subr.mxu0 0.0
  %534 = vmatpush1.xpose.msra.mxu0 0.0
  %535 = vmatprep.subr.mxu0 0.0
  %536 = vmatpush1.xpose.msra.mxu0 0.0
  %537 = vmatprep.subr.mxu0 0.0
  %538 = vmatpush1.xpose.msra.mxu0 0.0
  %539 = vmatprep.subr.mxu0 0.0
  %540 = vmatpush1.xpose.msra.mxu0 0.0
  %541 = vmatprep.subr.mxu0 0.0
  %542 = vmatpush1.xpose.msra.mxu0 0.0
  %543 = vmatprep.subr.mxu0 0.0
  %544 = vmatpush1.xpose.msra.mxu0 0.0
  %545 = vmatprep.subr.mxu0 0.0
  %546 = vmatpush1.xpose.msra.mxu0 0.0
  %547 = vmatprep.subr.mxu0 0.0
  %548 = vmatpush1.xpose.msra.mxu0 0.0
  %549 = vmatprep.subr.mxu0 0.0
  %550 = vmatpush1.xpose.msra.mxu0 0.0
  %551 = vmatprep.subr.mxu0 0.0
  %552 = vmatpush1.xpose.msra.mxu0 0.0
  %553 = vmatprep.subr.mxu0 0.0
  %554 = vmatpush1.xpose.msra.mxu0 0.0
  %555 = vmatprep.subr.mxu0 0.0
  %556 = vmatpush1.xpose.msra.mxu0 0.0
  %557 = vmatprep.subr.mxu0 0.0
  %558 = vmatpush1.xpose.msra.mxu0 0.0
  %559 = vmatprep.subr.mxu0 0.0
  %560 = vmatpush1.xpose.msra.mxu0 0.0
  %561 = vmatprep.subr.mxu0 0.0
  %562 = vmatpush1.xpose.msra.mxu0 0.0
  %563 = vmatprep.subr.mxu0 0.0
  %564 = vmatpush1.xpose.msra.mxu0 0.0
  %565 = vmatprep.subr.mxu0 0.0
  %566 = vmatpush1.xpose.msra.mxu0 0.0
  %567 = vmatprep.subr.mxu0 0.0
  %568 = vmatpush1.xpose.msra.mxu0 0.0
  %569 = vmatprep.subr.mxu0 0.0
  %570 = vmatpush1.xpose.msra.mxu0 0.0
  %571 = vmatprep.subr.mxu0 0.0
  %572 = vmatpush1.xpose.msra.mxu0 0.0
  %573 = vmatprep.mubr.f32.mxu0 %v229
  %574 = vmatmul.mubr.f32.gmra.mrb[0].mxu0 %v228
  %v575 = vpop.f32.mrb[0].mxu0
  %v576 = vadd.f32 %v491, %v575
  %v577 = vpop.f32.mrb[0].mxu0
  %578 = vmatprep.mubr.f32.mxu0 %v237
  %579 = vmatmul.mubr.f32.gmra.mrb[0].mxu0 %v236
  %v580 = vpop.f32.mrb[0].mxu0
  %v581 = vadd.f32 %v496, %v580
  %v582 = vpop.f32.mrb[0].mxu0
  %583 = vmatprep.mubr.f32.mxu0 %v245
  %584 = vmatmul.mubr.f32.gmra.mrb[0].mxu0 %v244
  %v585 = vpop.f32.mrb[0].mxu0
  %v586 = vadd.f32 %v501, %v585
  %v587 = vpop.f32.mrb[0].mxu0
  %588 = vmatprep.mubr.f32.mxu0 %v253
  %589 = vmatmul.mubr.f32.gmra.mrb[0].mxu0 %v252
  %v590 = vpop.f32.mrb[0].mxu0
  %v591 = vadd.f32 %v506, %v590
  %v592 = vpop.f32.mrb[0].mxu0
  %593 = vdwg.mxu0
  %v594 = vlaneseq
  %v595 = vshrl.u32 %v594, 7
  %v596 = vsub.s32 2, %v595
  %v597 = vrot.slane %v21, %v596
  %v598 = vmul.f32 %v597, %v576
  %v599 = vmul.f32 %v597, %v581
  %v600 = vmul.f32 %v597, %v586
  %v601 = vmul.f32 %v597, %v591
  %602 = vmatprep.subr.mxu0 %v143
  %603 = vmatpush1.xpose.msra.mxu0 %v142
  %604 = vmatprep.subr.mxu0 0.0
  %605 = vmatpush1.xpose.msra.mxu0 0.0
  %606 = vmatprep.subr.mxu0 0.0
  %607 = vmatpush1.xpose.msra.mxu0 0.0
  %608 = vmatprep.subr.mxu0 0.0
  %609 = vmatpush1.xpose.msra.mxu0 0.0
  %610 = vmatprep.subr.mxu0 0.0
  %611 = vmatpush1.xpose.msra.mxu0 0.0
  %612 = vmatprep.subr.mxu0 0.0
  %613 = vmatpush1.xpose.msra.mxu0 0.0
  %614 = vmatprep.subr.mxu0 0.0
  %615 = vmatpush1.xpose.msra.mxu0 0.0
  %616 = vmatprep.subr.mxu0 0.0
  %617 = vmatpush1.xpose.msra.mxu0 0.0
  %618 = vmatprep.subr.mxu0 0.0
  %619 = vmatpush1.xpose.msra.mxu0 0.0
  %620 = vmatprep.subr.mxu0 0.0
  %621 = vmatpush1.xpose.msra.mxu0 0.0
  %622 = vmatprep.subr.mxu0 0.0
  %623 = vmatpush1.xpose.msra.mxu0 0.0
  %624 = vmatprep.subr.mxu0 0.0
  %625 = vmatpush1.xpose.msra.mxu0 0.0
  %626 = vmatprep.subr.mxu0 0.0
  %627 = vmatpush1.xpose.msra.mxu0 0.0
  %628 = vmatprep.subr.mxu0 0.0
  %629 = vmatpush1.xpose.msra.mxu0 0.0
  %630 = vmatprep.subr.mxu0 0.0
  %631 = vmatpush1.xpose.msra.mxu0 0.0
  %632 = vmatprep.subr.mxu0 0.0
  %633 = vmatpush1.xpose.msra.mxu0 0.0
  %634 = vmatprep.subr.mxu0 0.0
  %635 = vmatpush1.xpose.msra.mxu0 0.0
  %636 = vmatprep.subr.mxu0 0.0
  %637 = vmatpush1.xpose.msra.mxu0 0.0
  %638 = vmatprep.subr.mxu0 0.0
  %639 = vmatpush1.xpose.msra.mxu0 0.0
  %640 = vmatprep.subr.mxu0 0.0
  %641 = vmatpush1.xpose.msra.mxu0 0.0
  %642 = vmatprep.subr.mxu0 0.0
  %643 = vmatpush1.xpose.msra.mxu0 0.0
  %644 = vmatprep.subr.mxu0 0.0
  %645 = vmatpush1.xpose.msra.mxu0 0.0
  %646 = vmatprep.subr.mxu0 0.0
  %647 = vmatpush1.xpose.msra.mxu0 0.0
  %648 = vmatprep.subr.mxu0 0.0
  %649 = vmatpush1.xpose.msra.mxu0 0.0
  %650 = vmatprep.subr.mxu0 0.0
  %651 = vmatpush1.xpose.msra.mxu0 0.0
  %652 = vmatprep.subr.mxu0 0.0
  %653 = vmatpush1.xpose.msra.mxu0 0.0
  %654 = vmatprep.subr.mxu0 0.0
  %655 = vmatpush1.xpose.msra.mxu0 0.0
  %656 = vmatprep.subr.mxu0 0.0
  %657 = vmatpush1.xpose.msra.mxu0 0.0
  %658 = vmatprep.subr.mxu0 0.0
  %659 = vmatpush1.xpose.msra.mxu0 0.0
  %660 = vmatprep.subr.mxu0 0.0
  %661 = vmatpush1.xpose.msra.mxu0 0.0
  %662 = vmatprep.subr.mxu0 0.0
  %663 = vmatpush1.xpose.msra.mxu0 0.0
  %664 = vmatprep.subr.mxu0 0.0
  %665 = vmatpush1.xpose.msra.mxu0 0.0
  %666 = vmatprep.mubr.f32.mxu0 %v159
  %667 = vmatmul.mubr.f32.gmra.mrb[0].mxu0 %v158
  %v668 = vpop.f32.mrb[0].mxu0
  %v669 = vadd.f32 %v598, %v668
  %v670 = vpop.f32.mrb[0].mxu0
  %671 = vmatprep.mubr.f32.mxu0 %v175
  %672 = vmatmul.mubr.f32.gmra.mrb[0].mxu0 %v174
  %v673 = vpop.f32.mrb[0].mxu0
  %v674 = vadd.f32 %v599, %v673
  %v675 = vpop.f32.mrb[0].mxu0
  %676 = vmatprep.mubr.f32.mxu0 %v191
  %677 = vmatmul.mubr.f32.gmra.mrb[0].mxu0 %v190
  %v678 = vpop.f32.mrb[0].mxu0
  %v679 = vadd.f32 %v600, %v678
  %v680 = vpop.f32.mrb[0].mxu0
  %681 = vmatprep.mubr.f32.mxu0 %v207
  %682 = vmatmul.mubr.f32.gmra.mrb[0].mxu0 %v206
  %v683 = vpop.f32.mrb[0].mxu0
  %v684 = vadd.f32 %v601, %v683
  %v685 = vpop.f32.mrb[0].mxu0
  %686 = vdwg.mxu0
  %687 = vmatprep.subr.mxu0 %v145
  %688 = vmatpush1.xpose.msra.mxu0 %v144
  %689 = vmatprep.subr.mxu0 0.0
  %690 = vmatpush1.xpose.msra.mxu0 0.0
  %691 = vmatprep.subr.mxu0 0.0
  %692 = vmatpush1.xpose.msra.mxu0 0.0
  %693 = vmatprep.subr.mxu0 0.0
  %694 = vmatpush1.xpose.msra.mxu0 0.0
  %695 = vmatprep.subr.mxu0 0.0
  %696 = vmatpush1.xpose.msra.mxu0 0.0
  %697 = vmatprep.subr.mxu0 0.0
  %698 = vmatpush1.xpose.msra.mxu0 0.0
  %699 = vmatprep.subr.mxu0 0.0
  %700 = vmatpush1.xpose.msra.mxu0 0.0
  %701 = vmatprep.subr.mxu0 0.0
  %702 = vmatpush1.xpose.msra.mxu0 0.0
  %703 = vmatprep.subr.mxu0 0.0
  %704 = vmatpush1.xpose.msra.mxu0 0.0
  %705 = vmatprep.subr.mxu0 0.0
  %706 = vmatpush1.xpose.msra.mxu0 0.0
  %707 = vmatprep.subr.mxu0 0.0
  %708 = vmatpush1.xpose.msra.mxu0 0.0
  %709 = vmatprep.subr.mxu0 0.0
  %710 = vmatpush1.xpose.msra.mxu0 0.0
  %711 = vmatprep.subr.mxu0 0.0
  %712 = vmatpush1.xpose.msra.mxu0 0.0
  %713 = vmatprep.subr.mxu0 0.0
  %714 = vmatpush1.xpose.msra.mxu0 0.0
  %715 = vmatprep.subr.mxu0 0.0
  %716 = vmatpush1.xpose.msra.mxu0 0.0
  %717 = vmatprep.subr.mxu0 0.0
  %718 = vmatpush1.xpose.msra.mxu0 0.0
  %719 = vmatprep.subr.mxu0 0.0
  %720 = vmatpush1.xpose.msra.mxu0 0.0
  %721 = vmatprep.subr.mxu0 0.0
  %722 = vmatpush1.xpose.msra.mxu0 0.0
  %723 = vmatprep.subr.mxu0 0.0
  %724 = vmatpush1.xpose.msra.mxu0 0.0
  %725 = vmatprep.subr.mxu0 0.0
  %726 = vmatpush1.xpose.msra.mxu0 0.0
  %727 = vmatprep.subr.mxu0 0.0
  %728 = vmatpush1.xpose.msra.mxu0 0.0
  %729 = vmatprep.subr.mxu0 0.0
  %730 = vmatpush1.xpose.msra.mxu0 0.0
  %731 = vmatprep.subr.mxu0 0.0
  %732 = vmatpush1.xpose.msra.mxu0 0.0
  %733 = vmatprep.subr.mxu0 0.0
  %734 = vmatpush1.xpose.msra.mxu0 0.0
  %735 = vmatprep.subr.mxu0 0.0
  %736 = vmatpush1.xpose.msra.mxu0 0.0
  %737 = vmatprep.subr.mxu0 0.0
  %738 = vmatpush1.xpose.msra.mxu0 0.0
  %739 = vmatprep.subr.mxu0 0.0
  %740 = vmatpush1.xpose.msra.mxu0 0.0
  %741 = vmatprep.subr.mxu0 0.0
  %742 = vmatpush1.xpose.msra.mxu0 0.0
  %743 = vmatprep.subr.mxu0 0.0
  %744 = vmatpush1.xpose.msra.mxu0 0.0
  %745 = vmatprep.subr.mxu0 0.0
  %746 = vmatpush1.xpose.msra.mxu0 0.0
  %747 = vmatprep.subr.mxu0 0.0
  %748 = vmatpush1.xpose.msra.mxu0 0.0
  %749 = vmatprep.subr.mxu0 0.0
  %750 = vmatpush1.xpose.msra.mxu0 0.0
  %751 = vmatprep.mubr.f32.mxu0 %v161
  %752 = vmatmul.mubr.f32.gmra.mrb[0].mxu0 %v160
  %v753 = vpop.f32.mrb[0].mxu0
  %v754 = vadd.f32 %v669, %v753
  %v755 = vpop.f32.mrb[0].mxu0
  %756 = vmatprep.mubr.f32.mxu0 %v177
  %757 = vmatmul.mubr.f32.gmra.mrb[0].mxu0 %v176
  %v758 = vpop.f32.mrb[0].mxu0
  %v759 = vadd.f32 %v674, %v758
  %v760 = vpop.f32.mrb[0].mxu0
  %761 = vmatprep.mubr.f32.mxu0 %v193
  %762 = vmatmul.mubr.f32.gmra.mrb[0].mxu0 %v192
  %v763 = vpop.f32.mrb[0].mxu0
  %v764 = vadd.f32 %v679, %v763
  %v765 = vpop.f32.mrb[0].mxu0
  %766 = vmatprep.mubr.f32.mxu0 %v209
  %767 = vmatmul.mubr.f32.gmra.mrb[0].mxu0 %v208
  %v768 = vpop.f32.mrb[0].mxu0
  %v769 = vadd.f32 %v684, %v768
  %v770 = vpop.f32.mrb[0].mxu0
  %771 = vdwg.mxu0
  %772 = vmatprep.subr.mxu0 %v147
  %773 = vmatpush1.xpose.msra.mxu0 %v146
  %774 = vmatprep.subr.mxu0 0.0
  %775 = vmatpush1.xpose.msra.mxu0 0.0
  %776 = vmatprep.subr.mxu0 0.0
  %777 = vmatpush1.xpose.msra.mxu0 0.0
  %778 = vmatprep.subr.mxu0 0.0
  %779 = vmatpush1.xpose.msra.mxu0 0.0
  %780 = vmatprep.subr.mxu0 0.0
  %781 = vmatpush1.xpose.msra.mxu0 0.0
  %782 = vmatprep.subr.mxu0 0.0
  %783 = vmatpush1.xpose.msra.mxu0 0.0
  %784 = vmatprep.subr.mxu0 0.0
  %785 = vmatpush1.xpose.msra.mxu0 0.0
  %786 = vmatprep.subr.mxu0 0.0
  %787 = vmatpush1.xpose.msra.mxu0 0.0
  %788 = vmatprep.subr.mxu0 0.0
  %789 = vmatpush1.xpose.msra.mxu0 0.0
  %790 = vmatprep.subr.mxu0 0.0
  %791 = vmatpush1.xpose.msra.mxu0 0.0
  %792 = vmatprep.subr.mxu0 0.0
  %793 = vmatpush1.xpose.msra.mxu0 0.0
  %794 = vmatprep.subr.mxu0 0.0
  %795 = vmatpush1.xpose.msra.mxu0 0.0
  %796 = vmatprep.subr.mxu0 0.0
  %797 = vmatpush1.xpose.msra.mxu0 0.0
  %798 = vmatprep.subr.mxu0 0.0
  %799 = vmatpush1.xpose.msra.mxu0 0.0
  %800 = vmatprep.subr.mxu0 0.0
  %801 = vmatpush1.xpose.msra.mxu0 0.0
  %802 = vmatprep.subr.mxu0 0.0
  %803 = vmatpush1.xpose.msra.mxu0 0.0
  %804 = vmatprep.subr.mxu0 0.0
  %805 = vmatpush1.xpose.msra.mxu0 0.0
  %806 = vmatprep.subr.mxu0 0.0
  %807 = vmatpush1.xpose.msra.mxu0 0.0
  %808 = vmatprep.subr.mxu0 0.0
  %809 = vmatpush1.xpose.msra.mxu0 0.0
  %810 = vmatprep.subr.mxu0 0.0
  %811 = vmatpush1.xpose.msra.mxu0 0.0
  %812 = vmatprep.subr.mxu0 0.0
  %813 = vmatpush1.xpose.msra.mxu0 0.0
  %814 = vmatprep.subr.mxu0 0.0
  %815 = vmatpush1.xpose.msra.mxu0 0.0
  %816 = vmatprep.subr.mxu0 0.0
  %817 = vmatpush1.xpose.msra.mxu0 0.0
  %818 = vmatprep.subr.mxu0 0.0
  %819 = vmatpush1.xpose.msra.mxu0 0.0
  %820 = vmatprep.subr.mxu0 0.0
  %821 = vmatpush1.xpose.msra.mxu0 0.0
  %822 = vmatprep.subr.mxu0 0.0
  %823 = vmatpush1.xpose.msra.mxu0 0.0
  %824 = vmatprep.subr.mxu0 0.0
  %825 = vmatpush1.xpose.msra.mxu0 0.0
  %826 = vmatprep.subr.mxu0 0.0
  %827 = vmatpush1.xpose.msra.mxu0 0.0
  %828 = vmatprep.subr.mxu0 0.0
  %829 = vmatpush1.xpose.msra.mxu0 0.0
  %830 = vmatprep.subr.mxu0 0.0
  %831 = vmatpush1.xpose.msra.mxu0 0.0
  %832 = vmatprep.subr.mxu0 0.0
  %833 = vmatpush1.xpose.msra.mxu0 0.0
  %834 = vmatprep.subr.mxu0 0.0
  %835 = vmatpush1.xpose.msra.mxu0 0.0
  %836 = vmatprep.mubr.f32.mxu0 %v163
  %837 = vmatmul.mubr.f32.gmra.mrb[0].mxu0 %v162
  %v838 = vpop.f32.mrb[0].mxu0
  %v839 = vadd.f32 %v754, %v838
  %v840 = vpop.f32.mrb[0].mxu0
  %841 = vmatprep.mubr.f32.mxu0 %v179
  %842 = vmatmul.mubr.f32.gmra.mrb[0].mxu0 %v178
  %v843 = vpop.f32.mrb[0].mxu0
  %v844 = vadd.f32 %v759, %v843
  %v845 = vpop.f32.mrb[0].mxu0
  %846 = vmatprep.mubr.f32.mxu0 %v195
  %847 = vmatmul.mubr.f32.gmra.mrb[0].mxu0 %v194
  %v848 = vpop.f32.mrb[0].mxu0
  %v849 = vadd.f32 %v764, %v848
  %v850 = vpop.f32.mrb[0].mxu0
  %851 = vmatprep.mubr.f32.mxu0 %v211
  %852 = vmatmul.mubr.f32.gmra.mrb[0].mxu0 %v210
  %v853 = vpop.f32.mrb[0].mxu0
  %v854 = vadd.f32 %v769, %v853
  %v855 = vpop.f32.mrb[0].mxu0
  %856 = vdwg.mxu0
  %857 = vmatprep.subr.mxu0 %v149
  %858 = vmatpush1.xpose.msra.mxu0 %v148
  %859 = vmatprep.subr.mxu0 0.0
  %860 = vmatpush1.xpose.msra.mxu0 0.0
  %861 = vmatprep.subr.mxu0 0.0
  %862 = vmatpush1.xpose.msra.mxu0 0.0
  %863 = vmatprep.subr.mxu0 0.0
  %864 = vmatpush1.xpose.msra.mxu0 0.0
  %865 = vmatprep.subr.mxu0 0.0
  %866 = vmatpush1.xpose.msra.mxu0 0.0
  %867 = vmatprep.subr.mxu0 0.0
  %868 = vmatpush1.xpose.msra.mxu0 0.0
  %869 = vmatprep.subr.mxu0 0.0
  %870 = vmatpush1.xpose.msra.mxu0 0.0
  %871 = vmatprep.subr.mxu0 0.0
  %872 = vmatpush1.xpose.msra.mxu0 0.0
  %873 = vmatprep.subr.mxu0 0.0
  %874 = vmatpush1.xpose.msra.mxu0 0.0
  %875 = vmatprep.subr.mxu0 0.0
  %876 = vmatpush1.xpose.msra.mxu0 0.0
  %877 = vmatprep.subr.mxu0 0.0
  %878 = vmatpush1.xpose.msra.mxu0 0.0
  %879 = vmatprep.subr.mxu0 0.0
  %880 = vmatpush1.xpose.msra.mxu0 0.0
  %881 = vmatprep.subr.mxu0 0.0
  %882 = vmatpush1.xpose.msra.mxu0 0.0
  %883 = vmatprep.subr.mxu0 0.0
  %884 = vmatpush1.xpose.msra.mxu0 0.0
  %885 = vmatprep.subr.mxu0 0.0
  %886 = vmatpush1.xpose.msra.mxu0 0.0
  %887 = vmatprep.subr.mxu0 0.0
  %888 = vmatpush1.xpose.msra.mxu0 0.0
  %889 = vmatprep.subr.mxu0 0.0
  %890 = vmatpush1.xpose.msra.mxu0 0.0
  %891 = vmatprep.subr.mxu0 0.0
  %892 = vmatpush1.xpose.msra.mxu0 0.0
  %893 = vmatprep.subr.mxu0 0.0
  %894 = vmatpush1.xpose.msra.mxu0 0.0
  %895 = vmatprep.subr.mxu0 0.0
  %896 = vmatpush1.xpose.msra.mxu0 0.0
  %897 = vmatprep.subr.mxu0 0.0
  %898 = vmatpush1.xpose.msra.mxu0 0.0
  %899 = vmatprep.subr.mxu0 0.0
  %900 = vmatpush1.xpose.msra.mxu0 0.0
  %901 = vmatprep.subr.mxu0 0.0
  %902 = vmatpush1.xpose.msra.mxu0 0.0
  %903 = vmatprep.subr.mxu0 0.0
  %904 = vmatpush1.xpose.msra.mxu0 0.0
  %905 = vmatprep.subr.mxu0 0.0
  %906 = vmatpush1.xpose.msra.mxu0 0.0
  %907 = vmatprep.subr.mxu0 0.0
  %908 = vmatpush1.xpose.msra.mxu0 0.0
  %909 = vmatprep.subr.mxu0 0.0
  %910 = vmatpush1.xpose.msra.mxu0 0.0
  %911 = vmatprep.subr.mxu0 0.0
  %912 = vmatpush1.xpose.msra.mxu0 0.0
  %913 = vmatprep.subr.mxu0 0.0
  %914 = vmatpush1.xpose.msra.mxu0 0.0
  %915 = vmatprep.subr.mxu0 0.0
  %916 = vmatpush1.xpose.msra.mxu0 0.0
  %917 = vmatprep.subr.mxu0 0.0
  %918 = vmatpush1.xpose.msra.mxu0 0.0
  %919 = vmatprep.subr.mxu0 0.0
  %920 = vmatpush1.xpose.msra.mxu0 0.0
  %921 = vmatprep.mubr.f32.mxu0 %v165
  %922 = vmatmul.mubr.f32.gmra.mrb[0].mxu0 %v164
  %v923 = vpop.f32.mrb[0].mxu0
  %v924 = vadd.f32 %v839, %v923
  %v925 = vpop.f32.mrb[0].mxu0
  %926 = vmatprep.mubr.f32.mxu0 %v181
  %927 = vmatmul.mubr.f32.gmra.mrb[0].mxu0 %v180
  %v928 = vpop.f32.mrb[0].mxu0
  %v929 = vadd.f32 %v844, %v928
  %v930 = vpop.f32.mrb[0].mxu0
  %931 = vmatprep.mubr.f32.mxu0 %v197
  %932 = vmatmul.mubr.f32.gmra.mrb[0].mxu0 %v196
  %v933 = vpop.f32.mrb[0].mxu0
  %v934 = vadd.f32 %v849, %v933
  %v935 = vpop.f32.mrb[0].mxu0
  %936 = vmatprep.mubr.f32.mxu0 %v213
  %937 = vmatmul.mubr.f32.gmra.mrb[0].mxu0 %v212
  %v938 = vpop.f32.mrb[0].mxu0
  %v939 = vadd.f32 %v854, %v938
  %v940 = vpop.f32.mrb[0].mxu0
  %941 = vdwg.mxu0
  %942 = vmatprep.subr.mxu0 %v151
  %943 = vmatpush1.xpose.msra.mxu0 %v150
  %944 = vmatprep.subr.mxu0 0.0
  %945 = vmatpush1.xpose.msra.mxu0 0.0
  %946 = vmatprep.subr.mxu0 0.0
  %947 = vmatpush1.xpose.msra.mxu0 0.0
  %948 = vmatprep.subr.mxu0 0.0
  %949 = vmatpush1.xpose.msra.mxu0 0.0
  %950 = vmatprep.subr.mxu0 0.0
  %951 = vmatpush1.xpose.msra.mxu0 0.0
  %952 = vmatprep.subr.mxu0 0.0
  %953 = vmatpush1.xpose.msra.mxu0 0.0
  %954 = vmatprep.subr.mxu0 0.0
  %955 = vmatpush1.xpose.msra.mxu0 0.0
  %956 = vmatprep.subr.mxu0 0.0
  %957 = vmatpush1.xpose.msra.mxu0 0.0
  %958 = vmatprep.subr.mxu0 0.0
  %959 = vmatpush1.xpose.msra.mxu0 0.0
  %960 = vmatprep.subr.mxu0 0.0
  %961 = vmatpush1.xpose.msra.mxu0 0.0
  %962 = vmatprep.subr.mxu0 0.0
  %963 = vmatpush1.xpose.msra.mxu0 0.0
  %964 = vmatprep.subr.mxu0 0.0
  %965 = vmatpush1.xpose.msra.mxu0 0.0
  %966 = vmatprep.subr.mxu0 0.0
  %967 = vmatpush1.xpose.msra.mxu0 0.0
  %968 = vmatprep.subr.mxu0 0.0
  %969 = vmatpush1.xpose.msra.mxu0 0.0
  %970 = vmatprep.subr.mxu0 0.0
  %971 = vmatpush1.xpose.msra.mxu0 0.0
  %972 = vmatprep.subr.mxu0 0.0
  %973 = vmatpush1.xpose.msra.mxu0 0.0
  %974 = vmatprep.subr.mxu0 0.0
  %975 = vmatpush1.xpose.msra.mxu0 0.0
  %976 = vmatprep.subr.mxu0 0.0
  %977 = vmatpush1.xpose.msra.mxu0 0.0
  %978 = vmatprep.subr.mxu0 0.0
  %979 = vmatpush1.xpose.msra.mxu0 0.0
  %980 = vmatprep.subr.mxu0 0.0
  %981 = vmatpush1.xpose.msra.mxu0 0.0
  %982 = vmatprep.subr.mxu0 0.0
  %983 = vmatpush1.xpose.msra.mxu0 0.0
  %984 = vmatprep.subr.mxu0 0.0
  %985 = vmatpush1.xpose.msra.mxu0 0.0
  %986 = vmatprep.subr.mxu0 0.0
  %987 = vmatpush1.xpose.msra.mxu0 0.0
  %988 = vmatprep.subr.mxu0 0.0
  %989 = vmatpush1.xpose.msra.mxu0 0.0
  %990 = vmatprep.subr.mxu0 0.0
  %991 = vmatpush1.xpose.msra.mxu0 0.0
  %992 = vmatprep.subr.mxu0 0.0
  %993 = vmatpush1.xpose.msra.mxu0 0.0
  %994 = vmatprep.subr.mxu0 0.0
  %995 = vmatpush1.xpose.msra.mxu0 0.0
  %996 = vmatprep.subr.mxu0 0.0
  %997 = vmatpush1.xpose.msra.mxu0 0.0
  %998 = vmatprep.subr.mxu0 0.0
  %999 = vmatpush1.xpose.msra.mxu0 0.0
  %1000 = vmatprep.subr.mxu0 0.0
  %1001 = vmatpush1.xpose.msra.mxu0 0.0
  %1002 = vmatprep.subr.mxu0 0.0
  %1003 = vmatpush1.xpose.msra.mxu0 0.0
  %1004 = vmatprep.subr.mxu0 0.0
  %1005 = vmatpush1.xpose.msra.mxu0 0.0
  %1006 = vmatprep.mubr.f32.mxu0 %v167
  %1007 = vmatmul.mubr.f32.gmra.mrb[0].mxu0 %v166
  %v1008 = vpop.f32.mrb[0].mxu0
  %v1009 = vadd.f32 %v924, %v1008
  %v1010 = vpop.f32.mrb[0].mxu0
  %1011 = vmatprep.mubr.f32.mxu0 %v183
  %1012 = vmatmul.mubr.f32.gmra.mrb[0].mxu0 %v182
  %v1013 = vpop.f32.mrb[0].mxu0
  %v1014 = vadd.f32 %v929, %v1013
  %v1015 = vpop.f32.mrb[0].mxu0
  %1016 = vmatprep.mubr.f32.mxu0 %v199
  %1017 = vmatmul.mubr.f32.gmra.mrb[0].mxu0 %v198
  %v1018 = vpop.f32.mrb[0].mxu0
  %v1019 = vadd.f32 %v934, %v1018
  %v1020 = vpop.f32.mrb[0].mxu0
  %1021 = vmatprep.mubr.f32.mxu0 %v215
  %1022 = vmatmul.mubr.f32.gmra.mrb[0].mxu0 %v214
  %v1023 = vpop.f32.mrb[0].mxu0
  %v1024 = vadd.f32 %v939, %v1023
  %v1025 = vpop.f32.mrb[0].mxu0
  %1026 = vdwg.mxu0
  %1027 = vmatprep.subr.mxu0 %v153
  %1028 = vmatpush1.xpose.msra.mxu0 %v152
  %1029 = vmatprep.subr.mxu0 0.0
  %1030 = vmatpush1.xpose.msra.mxu0 0.0
  %1031 = vmatprep.subr.mxu0 0.0
  %1032 = vmatpush1.xpose.msra.mxu0 0.0
  %1033 = vmatprep.subr.mxu0 0.0
  %1034 = vmatpush1.xpose.msra.mxu0 0.0
  %1035 = vmatprep.subr.mxu0 0.0
  %1036 = vmatpush1.xpose.msra.mxu0 0.0
  %1037 = vmatprep.subr.mxu0 0.0
  %1038 = vmatpush1.xpose.msra.mxu0 0.0
  %1039 = vmatprep.subr.mxu0 0.0
  %1040 = vmatpush1.xpose.msra.mxu0 0.0
  %1041 = vmatprep.subr.mxu0 0.0
  %1042 = vmatpush1.xpose.msra.mxu0 0.0
  %1043 = vmatprep.subr.mxu0 0.0
  %1044 = vmatpush1.xpose.msra.mxu0 0.0
  %1045 = vmatprep.subr.mxu0 0.0
  %1046 = vmatpush1.xpose.msra.mxu0 0.0
  %1047 = vmatprep.subr.mxu0 0.0
  %1048 = vmatpush1.xpose.msra.mxu0 0.0
  %1049 = vmatprep.subr.mxu0 0.0
  %1050 = vmatpush1.xpose.msra.mxu0 0.0
  %1051 = vmatprep.subr.mxu0 0.0
  %1052 = vmatpush1.xpose.msra.mxu0 0.0
  %1053 = vmatprep.subr.mxu0 0.0
  %1054 = vmatpush1.xpose.msra.mxu0 0.0
  %1055 = vmatprep.subr.mxu0 0.0
  %1056 = vmatpush1.xpose.msra.mxu0 0.0
  %1057 = vmatprep.subr.mxu0 0.0
  %1058 = vmatpush1.xpose.msra.mxu0 0.0
  %1059 = vmatprep.subr.mxu0 0.0
  %1060 = vmatpush1.xpose.msra.mxu0 0.0
  %1061 = vmatprep.subr.mxu0 0.0
  %1062 = vmatpush1.xpose.msra.mxu0 0.0
  %1063 = vmatprep.subr.mxu0 0.0
  %1064 = vmatpush1.xpose.msra.mxu0 0.0
  %1065 = vmatprep.subr.mxu0 0.0
  %1066 = vmatpush1.xpose.msra.mxu0 0.0
  %1067 = vmatprep.subr.mxu0 0.0
  %1068 = vmatpush1.xpose.msra.mxu0 0.0
  %1069 = vmatprep.subr.mxu0 0.0
  %1070 = vmatpush1.xpose.msra.mxu0 0.0
  %1071 = vmatprep.subr.mxu0 0.0
  %1072 = vmatpush1.xpose.msra.mxu0 0.0
  %1073 = vmatprep.subr.mxu0 0.0
  %1074 = vmatpush1.xpose.msra.mxu0 0.0
  %1075 = vmatprep.subr.mxu0 0.0
  %1076 = vmatpush1.xpose.msra.mxu0 0.0
  %1077 = vmatprep.subr.mxu0 0.0
  %1078 = vmatpush1.xpose.msra.mxu0 0.0
  %1079 = vmatprep.subr.mxu0 0.0
  %1080 = vmatpush1.xpose.msra.mxu0 0.0
  %1081 = vmatprep.subr.mxu0 0.0
  %1082 = vmatpush1.xpose.msra.mxu0 0.0
  %1083 = vmatprep.subr.mxu0 0.0
  %1084 = vmatpush1.xpose.msra.mxu0 0.0
  %1085 = vmatprep.subr.mxu0 0.0
  %1086 = vmatpush1.xpose.msra.mxu0 0.0
  %1087 = vmatprep.subr.mxu0 0.0
  %1088 = vmatpush1.xpose.msra.mxu0 0.0
  %1089 = vmatprep.subr.mxu0 0.0
  %1090 = vmatpush1.xpose.msra.mxu0 0.0
  %1091 = vmatprep.mubr.f32.mxu0 %v169
  %1092 = vmatmul.mubr.f32.gmra.mrb[0].mxu0 %v168
  %v1093 = vpop.f32.mrb[0].mxu0
  %v1094 = vadd.f32 %v1009, %v1093
  %v1095 = vpop.f32.mrb[0].mxu0
  %1096 = vmatprep.mubr.f32.mxu0 %v185
  %1097 = vmatmul.mubr.f32.gmra.mrb[0].mxu0 %v184
  %v1098 = vpop.f32.mrb[0].mxu0
  %v1099 = vadd.f32 %v1014, %v1098
  %v1100 = vpop.f32.mrb[0].mxu0
  %1101 = vmatprep.mubr.f32.mxu0 %v201
  %1102 = vmatmul.mubr.f32.gmra.mrb[0].mxu0 %v200
  %v1103 = vpop.f32.mrb[0].mxu0
  %v1104 = vadd.f32 %v1019, %v1103
  %v1105 = vpop.f32.mrb[0].mxu0
  %1106 = vmatprep.mubr.f32.mxu0 %v217
  %1107 = vmatmul.mubr.f32.gmra.mrb[0].mxu0 %v216
  %v1108 = vpop.f32.mrb[0].mxu0
  %v1109 = vadd.f32 %v1024, %v1108
  %v1110 = vpop.f32.mrb[0].mxu0
  %1111 = vdwg.mxu0
  %1112 = vmatprep.subr.mxu0 %v155
  %1113 = vmatpush1.xpose.msra.mxu0 %v154
  %1114 = vmatprep.subr.mxu0 0.0
  %1115 = vmatpush1.xpose.msra.mxu0 0.0
  %1116 = vmatprep.subr.mxu0 0.0
  %1117 = vmatpush1.xpose.msra.mxu0 0.0
  %1118 = vmatprep.subr.mxu0 0.0
  %1119 = vmatpush1.xpose.msra.mxu0 0.0
  %1120 = vmatprep.subr.mxu0 0.0
  %1121 = vmatpush1.xpose.msra.mxu0 0.0
  %1122 = vmatprep.subr.mxu0 0.0
  %1123 = vmatpush1.xpose.msra.mxu0 0.0
  %1124 = vmatprep.subr.mxu0 0.0
  %1125 = vmatpush1.xpose.msra.mxu0 0.0
  %1126 = vmatprep.subr.mxu0 0.0
  %1127 = vmatpush1.xpose.msra.mxu0 0.0
  %1128 = vmatprep.subr.mxu0 0.0
  %1129 = vmatpush1.xpose.msra.mxu0 0.0
  %1130 = vmatprep.subr.mxu0 0.0
  %1131 = vmatpush1.xpose.msra.mxu0 0.0
  %1132 = vmatprep.subr.mxu0 0.0
  %1133 = vmatpush1.xpose.msra.mxu0 0.0
  %1134 = vmatprep.subr.mxu0 0.0
  %1135 = vmatpush1.xpose.msra.mxu0 0.0
  %1136 = vmatprep.subr.mxu0 0.0
  %1137 = vmatpush1.xpose.msra.mxu0 0.0
  %1138 = vmatprep.subr.mxu0 0.0
  %1139 = vmatpush1.xpose.msra.mxu0 0.0
  %1140 = vmatprep.subr.mxu0 0.0
  %1141 = vmatpush1.xpose.msra.mxu0 0.0
  %1142 = vmatprep.subr.mxu0 0.0
  %1143 = vmatpush1.xpose.msra.mxu0 0.0
  %1144 = vmatprep.subr.mxu0 0.0
  %1145 = vmatpush1.xpose.msra.mxu0 0.0
  %1146 = vmatprep.subr.mxu0 0.0
  %1147 = vmatpush1.xpose.msra.mxu0 0.0
  %1148 = vmatprep.subr.mxu0 0.0
  %1149 = vmatpush1.xpose.msra.mxu0 0.0
  %1150 = vmatprep.subr.mxu0 0.0
  %1151 = vmatpush1.xpose.msra.mxu0 0.0
  %1152 = vmatprep.subr.mxu0 0.0
  %1153 = vmatpush1.xpose.msra.mxu0 0.0
  %1154 = vmatprep.subr.mxu0 0.0
  %1155 = vmatpush1.xpose.msra.mxu0 0.0
  %1156 = vmatprep.subr.mxu0 0.0
  %1157 = vmatpush1.xpose.msra.mxu0 0.0
  %1158 = vmatprep.subr.mxu0 0.0
  %1159 = vmatpush1.xpose.msra.mxu0 0.0
  %1160 = vmatprep.subr.mxu0 0.0
  %1161 = vmatpush1.xpose.msra.mxu0 0.0
  %1162 = vmatprep.subr.mxu0 0.0
  %1163 = vmatpush1.xpose.msra.mxu0 0.0
  %1164 = vmatprep.subr.mxu0 0.0
  %1165 = vmatpush1.xpose.msra.mxu0 0.0
  %1166 = vmatprep.subr.mxu0 0.0
  %1167 = vmatpush1.xpose.msra.mxu0 0.0
  %1168 = vmatprep.subr.mxu0 0.0
  %1169 = vmatpush1.xpose.msra.mxu0 0.0
  %1170 = vmatprep.subr.mxu0 0.0
  %1171 = vmatpush1.xpose.msra.mxu0 0.0
  %1172 = vmatprep.subr.mxu0 0.0
  %1173 = vmatpush1.xpose.msra.mxu0 0.0
  %1174 = vmatprep.subr.mxu0 0.0
  %1175 = vmatpush1.xpose.msra.mxu0 0.0
  %1176 = vmatprep.mubr.f32.mxu0 %v171
  %1177 = vmatmul.mubr.f32.gmra.mrb[0].mxu0 %v170
  %v1178 = vpop.f32.mrb[0].mxu0
  %v1179 = vadd.f32 %v1094, %v1178
  %v1180 = vpop.f32.mrb[0].mxu0
  %1181 = vmatprep.mubr.f32.mxu0 %v187
  %1182 = vmatmul.mubr.f32.gmra.mrb[0].mxu0 %v186
  %v1183 = vpop.f32.mrb[0].mxu0
  %v1184 = vadd.f32 %v1099, %v1183
  %v1185 = vpop.f32.mrb[0].mxu0
  %1186 = vmatprep.mubr.f32.mxu0 %v203
  %1187 = vmatmul.mubr.f32.gmra.mrb[0].mxu0 %v202
  %v1188 = vpop.f32.mrb[0].mxu0
  %v1189 = vadd.f32 %v1104, %v1188
  %v1190 = vpop.f32.mrb[0].mxu0
  %1191 = vmatprep.mubr.f32.mxu0 %v219
  %1192 = vmatmul.mubr.f32.gmra.mrb[0].mxu0 %v218
  %v1193 = vpop.f32.mrb[0].mxu0
  %v1194 = vadd.f32 %v1109, %v1193
  %v1195 = vpop.f32.mrb[0].mxu0
  %1196 = vdwg.mxu0
  %1197 = vmatprep.subr.mxu0 %v157
  %1198 = vmatpush1.xpose.msra.mxu0 %v156
  %1199 = vmatprep.subr.mxu0 0.0
  %1200 = vmatpush1.xpose.msra.mxu0 0.0
  %1201 = vmatprep.subr.mxu0 0.0
  %1202 = vmatpush1.xpose.msra.mxu0 0.0
  %1203 = vmatprep.subr.mxu0 0.0
  %1204 = vmatpush1.xpose.msra.mxu0 0.0
  %1205 = vmatprep.subr.mxu0 0.0
  %1206 = vmatpush1.xpose.msra.mxu0 0.0
  %1207 = vmatprep.subr.mxu0 0.0
  %1208 = vmatpush1.xpose.msra.mxu0 0.0
  %1209 = vmatprep.subr.mxu0 0.0
  %1210 = vmatpush1.xpose.msra.mxu0 0.0
  %1211 = vmatprep.subr.mxu0 0.0
  %1212 = vmatpush1.xpose.msra.mxu0 0.0
  %1213 = vmatprep.subr.mxu0 0.0
  %1214 = vmatpush1.xpose.msra.mxu0 0.0
  %1215 = vmatprep.subr.mxu0 0.0
  %1216 = vmatpush1.xpose.msra.mxu0 0.0
  %1217 = vmatprep.subr.mxu0 0.0
  %1218 = vmatpush1.xpose.msra.mxu0 0.0
  %1219 = vmatprep.subr.mxu0 0.0
  %1220 = vmatpush1.xpose.msra.mxu0 0.0
  %1221 = vmatprep.subr.mxu0 0.0
  %1222 = vmatpush1.xpose.msra.mxu0 0.0
  %1223 = vmatprep.subr.mxu0 0.0
  %1224 = vmatpush1.xpose.msra.mxu0 0.0
  %1225 = vmatprep.subr.mxu0 0.0
  %1226 = vmatpush1.xpose.msra.mxu0 0.0
  %1227 = vmatprep.subr.mxu0 0.0
  %1228 = vmatpush1.xpose.msra.mxu0 0.0
  %1229 = vmatprep.subr.mxu0 0.0
  %1230 = vmatpush1.xpose.msra.mxu0 0.0
  %1231 = vmatprep.subr.mxu0 0.0
  %1232 = vmatpush1.xpose.msra.mxu0 0.0
  %1233 = vmatprep.subr.mxu0 0.0
  %1234 = vmatpush1.xpose.msra.mxu0 0.0
  %1235 = vmatprep.subr.mxu0 0.0
  %1236 = vmatpush1.xpose.msra.mxu0 0.0
  %1237 = vmatprep.subr.mxu0 0.0
  %1238 = vmatpush1.xpose.msra.mxu0 0.0
  %1239 = vmatprep.subr.mxu0 0.0
  %1240 = vmatpush1.xpose.msra.mxu0 0.0
  %1241 = vmatprep.subr.mxu0 0.0
  %1242 = vmatpush1.xpose.msra.mxu0 0.0
  %1243 = vmatprep.subr.mxu0 0.0
  %1244 = vmatpush1.xpose.msra.mxu0 0.0
  %1245 = vmatprep.subr.mxu0 0.0
  %1246 = vmatpush1.xpose.msra.mxu0 0.0
  %1247 = vmatprep.subr.mxu0 0.0
  %1248 = vmatpush1.xpose.msra.mxu0 0.0
  %1249 = vmatprep.subr.mxu0 0.0
  %1250 = vmatpush1.xpose.msra.mxu0 0.0
  %1251 = vmatprep.subr.mxu0 0.0
  %1252 = vmatpush1.xpose.msra.mxu0 0.0
  %1253 = vmatprep.subr.mxu0 0.0
  %1254 = vmatpush1.xpose.msra.mxu0 0.0
  %1255 = vmatprep.subr.mxu0 0.0
  %1256 = vmatpush1.xpose.msra.mxu0 0.0
  %1257 = vmatprep.subr.mxu0 0.0
  %1258 = vmatpush1.xpose.msra.mxu0 0.0
  %1259 = vmatprep.subr.mxu0 0.0
  %1260 = vmatpush1.xpose.msra.mxu0 0.0
  %1261 = vmatprep.mubr.f32.mxu0 %v173
  %1262 = vmatmul.mubr.f32.gmra.mrb[0].mxu0 %v172
  %v1263 = vpop.f32.mrb[0].mxu0
  %v1264 = vadd.f32 %v1179, %v1263
  %v1265 = vpop.f32.mrb[0].mxu0
  %1266 = vmatprep.mubr.f32.mxu0 %v189
  %1267 = vmatmul.mubr.f32.gmra.mrb[0].mxu0 %v188
  %v1268 = vpop.f32.mrb[0].mxu0
  %v1269 = vadd.f32 %v1184, %v1268
  %v1270 = vpop.f32.mrb[0].mxu0
  %1271 = vmatprep.mubr.f32.mxu0 %v205
  %1272 = vmatmul.mubr.f32.gmra.mrb[0].mxu0 %v204
  %v1273 = vpop.f32.mrb[0].mxu0
  %v1274 = vadd.f32 %v1189, %v1273
  %v1275 = vpop.f32.mrb[0].mxu0
  %1276 = vmatprep.mubr.f32.mxu0 %v221
  %1277 = vmatmul.mubr.f32.gmra.mrb[0].mxu0 %v220
  %v1278 = vpop.f32.mrb[0].mxu0
  %v1279 = vadd.f32 %v1194, %v1278
  %v1280 = vpop.f32.mrb[0].mxu0
  %1281 = vdwg.mxu0
  %1282 = vxpose.xlu0.b32.start [1/16] %v1264, 128
  %1283 = vxpose.xlu0.b32.cont [2/16] %v1269, 128
  %1284 = vxpose.xlu0.b32.cont [3/16] %v1274, 128
  %1285 = vxpose.xlu0.b32.cont [4/16] %v1279, 128
  %1286 = vxpose.xlu0.b32.cont [5/16] 0.0, 128
  %1287 = vxpose.xlu0.b32.cont [6/16] 0.0, 128
  %1288 = vxpose.xlu0.b32.cont [7/16] 0.0, 128
  %1289 = vxpose.xlu0.b32.cont [8/16] 0.0, 128
  %1290 = vxpose.xlu0.b32.cont [9/16] 0.0, 128
  %1291 = vxpose.xlu0.b32.cont [10/16] 0.0, 128
  %1292 = vxpose.xlu0.b32.cont [11/16] 0.0, 128
  %1293 = vxpose.xlu0.b32.cont [12/16] 0.0, 128
  %1294 = vxpose.xlu0.b32.cont [13/16] 0.0, 128
  %1295 = vxpose.xlu0.b32.cont [14/16] 0.0, 128
  %1296 = vxpose.xlu0.b32.cont [15/16] 0.0, 128
  %1297 = vxpose.xlu0.b32.end [16/16] 0.0, 128
  %v1298 = vpop.trf.xlu0
  %v1299 = vpop.trf.xlu0
  %v1300 = vpop.trf.xlu0
  %v1301 = vpop.trf.xlu0
  %v1302 = vpop.trf.xlu0
  %v1303 = vpop.trf.xlu0
  %v1304 = vpop.trf.xlu0
  %v1305 = vpop.trf.xlu0
  %v1306 = vpop.trf.xlu0
  %v1307 = vpop.trf.xlu0
  %v1308 = vpop.trf.xlu0
  %v1309 = vpop.trf.xlu0
  %v1310 = vpop.trf.xlu0
  %v1311 = vpop.trf.xlu0
  %v1312 = vpop.trf.xlu0
  %v1313 = vpop.trf.xlu0
  %v1314 = vlaneseq
  %v1315 = vshrl.u32 %v1314, 7
  %v1316 = vsub.s32 0, %v1315
  %v1317 = vrot.slane %v21, %v1316
  %v1318 = vadd.f32 %v1298, %v1317
  %v1319 = vmax.f32 %v1318, 0.0
  %v1320 = vlaneseq
  %v1321 = vshrl.u32 %v1320, 7
  %v1322 = vsub.s32 1, %v1321
  %v1323 = vrot.slane %v21, %v1322
  %vm1324 = vcmask 261120
  %v1326 = vsel %vm1324, %v1319, 0
  %1328 = vmatprep.subr.mxu0 0.0
  %1329 = vmatpush1.msra.mxu0 %v17
  %1330 = vmatprep.subr.mxu0 0.0
  %1331 = vmatpush1.msra.mxu0 %v18
  %1332 = vmatprep.subr.mxu0 0.0
  %1333 = vmatpush1.msra.mxu0 %v19
  %1334 = vmatprep.subr.mxu0 0.0
  %1335 = vmatpush1.msra.mxu0 %v20
  %1336 = vmatprep.subr.mxu0 0.0
  %1337 = vmatpush1.msra.mxu0 0.0
  %1338 = vmatprep.subr.mxu0 0.0
  %1339 = vmatpush1.msra.mxu0 0.0
  %1340 = vmatprep.subr.mxu0 0.0
  %1341 = vmatpush1.msra.mxu0 0.0
  %1342 = vmatprep.subr.mxu0 0.0
  %1343 = vmatpush1.msra.mxu0 0.0
  %1344 = vmatprep.subr.mxu0 0.0
  %1345 = vmatpush1.msra.mxu0 0.0
  %1346 = vmatprep.subr.mxu0 0.0
  %1347 = vmatpush1.msra.mxu0 0.0
  %1348 = vmatprep.subr.mxu0 0.0
  %1349 = vmatpush1.msra.mxu0 0.0
  %1350 = vmatprep.subr.mxu0 0.0
  %1351 = vmatpush1.msra.mxu0 0.0
  %1352 = vmatprep.subr.mxu0 0.0
  %1353 = vmatpush1.msra.mxu0 0.0
  %1354 = vmatprep.subr.mxu0 0.0
  %1355 = vmatpush1.msra.mxu0 0.0
  %1356 = vmatprep.subr.mxu0 0.0
  %1357 = vmatpush1.msra.mxu0 0.0
  %1358 = vmatprep.subr.mxu0 0.0
  %1359 = vmatpush1.msra.mxu0 0.0
  %1360 = vmatprep.subr.mxu0 0.0
  %1361 = vmatpush1.msra.mxu0 0.0
  %1362 = vmatprep.subr.mxu0 0.0
  %1363 = vmatpush1.msra.mxu0 0.0
  %1364 = vmatprep.subr.mxu0 0.0
  %1365 = vmatpush1.msra.mxu0 0.0
  %1366 = vmatprep.subr.mxu0 0.0
  %1367 = vmatpush1.msra.mxu0 0.0
  %1368 = vmatprep.subr.mxu0 0.0
  %1369 = vmatpush1.msra.mxu0 0.0
  %1370 = vmatprep.subr.mxu0 0.0
  %1371 = vmatpush1.msra.mxu0 0.0
  %1372 = vmatprep.subr.mxu0 0.0
  %1373 = vmatpush1.msra.mxu0 0.0
  %1374 = vmatprep.subr.mxu0 0.0
  %1375 = vmatpush1.msra.mxu0 0.0
  %1376 = vmatprep.subr.mxu0 0.0
  %1377 = vmatpush1.msra.mxu0 0.0
  %1378 = vmatprep.subr.mxu0 0.0
  %1379 = vmatpush1.msra.mxu0 0.0
  %1380 = vmatprep.subr.mxu0 0.0
  %1381 = vmatpush1.msra.mxu0 0.0
  %1382 = vmatprep.subr.mxu0 0.0
  %1383 = vmatpush1.msra.mxu0 0.0
  %1384 = vmatprep.subr.mxu0 0.0
  %1385 = vmatpush1.msra.mxu0 0.0
  %1386 = vmatprep.subr.mxu0 0.0
  %1387 = vmatpush1.msra.mxu0 0.0
  %1388 = vmatprep.subr.mxu0 0.0
  %1389 = vmatpush1.msra.mxu0 0.0
  %1390 = vmatprep.subr.mxu0 0.0
  %1391 = vmatpush1.msra.mxu0 0.0
  %1392 = vmatprep.mubr.f32.mxu0 0.0
  %1393 = vmatmul.mubr.f32.gmra.mrb[0].mxu0 %v1326
  %v1394 = vpop.f32.mrb[0].mxu0
  %v1395 = vadd.f32 %v1323, %v1394
  %v1396 = vpop.f32.mrb[0].mxu0
  %1397 = vdwg.mxu0
  %vm1398 = vcmask 31744
  %1399 = vst.msk [vmem:[%s4] sm:$0xff] %vm1398, %v1395
  // Predicated region
  $region18: #{encoded_context_forward.1} parent=0 // pred_check
    _
  $region19: #{encoded_context_forward.1} parent=0 // pred_check_branch
    %1401 = sbr.rel (0) target = $region21
  $region20: #{encoded_context_forward.1} parent=0 // pred_region
    _
  $region21: #{encoded_context_forward.1} parent=0 // pred_fallthru
    _
  // Predicated region
  $region22: #{encoded_context_forward.1} parent=0 // pred_check
    _
  $region23: #{encoded_context_forward.1} parent=0 // pred_check_branch
    %1403 = sbr.rel (0) target = $region25
  $region24: #{encoded_context_forward.1} parent=0 // pred_region
    _
  $region25: #{encoded_context_forward.1} parent=0 // pred_fallthru
    _

</llo_original>
